<compile_context>
chip_gen: v7x
topology: tpu7x:2x2x1
jax: 0.10.0
libtpu: 0.0.40
codegen_flags: <defaults>
</compile_context>

<pallas_src>
import math

import jax
import jax.numpy as jnp
from jax.experimental import pallas as pl
from jax.experimental.pallas import tpu as pltpu

NUM_EMOTIONS = 8
LANES = 128


def _round_up(x, m):
    return ((x + m - 1) // m) * m


def _emotion_kernel(x_ref, wa_ref, ba_ref, wf_ref, bf_ref, wm_ref, bm_ref, o_ref):
    num_emotions = wf_ref.shape[0]
    # bf16 MXU operands, f32 accumulation everywhere.
    x = x_ref[...].astype(jnp.bfloat16)                                   # (TM, H)

    # Analyzer logits over a full 128-lane block; padded lanes carry a -1e30
    # bias so they contribute exactly 0 to the softmax sum.
    logits = jnp.dot(x, wa_ref[...], preferred_element_type=jnp.float32)  # (TM, 128)
    logits = logits + ba_ref[...]
    m = jnp.max(logits, axis=-1, keepdims=True)
    unnorm = jnp.exp(logits - m)
    denom = jnp.sum(unnorm, axis=-1, keepdims=True)
    scores = unnorm * pl.reciprocal(denom, approx=True)                   # (TM, 128)

    # Per-emotion amplifier matmuls; `combined` initialised with the e=0 term.
    combined = None
    for e in range(num_emotions):
        amp = jnp.dot(x, wf_ref[e], preferred_element_type=jnp.float32)   # (TM, Hp)
        amp = amp + bf_ref[e]
        term = scores[:, e:e + 1] * amp
        combined = term if combined is None else combined + term

    # Emotion mixer (zero-padded Wm rows multiply the zero padded columns).
    out = jnp.dot(combined.astype(jnp.bfloat16), wm_ref[...],
                  preferred_element_type=jnp.float32)                     # (TM, H)
    out = out + bm_ref[...]
    o_ref[...] = out.astype(o_ref.dtype)


def prepare_fused_params(params, compute_dtype=jnp.bfloat16):
    """One-time host-side weight repacking (do NOT call per step in real use)."""
    we, be = params["we"], params["be"]          # (8, H, H), (8, H)
    wa, ba = params["wa"], params["ba"]          # (H, 8),    (1, 8)
    wm, bm = params["wm"], params["bm"]          # (H, H),    (1, H)
    ne, H, _ = we.shape
    Hp = _round_up(H, LANES)

    # Amplifiers: one 128-aligned slab per emotion (zero column padding).
    wf = jnp.pad(we, ((0, 0), (0, 0), (0, Hp - H))).astype(compute_dtype)     # (8, H, Hp)
    bf = jnp.pad(be, ((0, 0), (0, Hp - H))).reshape(ne, 1, Hp).astype(jnp.float32)

    # Analyzer: pad to a full lane block; -1e30 bias on the padding kills its
    # softmax weight exactly (exp underflows to 0).
    wa_p = jnp.pad(wa, ((0, 0), (0, LANES - ne))).astype(compute_dtype)       # (H, 128)
    ba_p = jnp.pad(ba, ((0, 0), (0, LANES - ne)),
                   constant_values=-1e30).astype(jnp.float32)                 # (1, 128)

    # Mixer: pad the contraction dim to Hp (combined's padded columns are 0).
    wm_p = jnp.pad(wm, ((0, Hp - H), (0, 0))).astype(compute_dtype)           # (Hp, H)
    bm_p = bm.astype(jnp.float32)                                             # (1, H)

    return {"wa": wa_p, "ba": ba_p, "wf": wf, "bf": bf, "wm": wm_p, "bm": bm_p,
            "hidden": H, "hidden_padded": Hp}


def emotional_manipulator_forward(hidden_states, fused_params, *, tile_m=256):
    """hidden_states: (B, S, H) float32; fused_params: from prepare_fused_params."""
    B, S, H = hidden_states.shape
    assert H == fused_params["hidden"]
    M = B * S
    x = hidden_states.reshape(M, H)

    # Row tile: full M if small (always a legal block), otherwise tile_m (a
    # multiple of 8).  A ragged last block is masked by Pallas, so there is no
    # host-side padding copy of x.
    tm = M if M <= tile_m else tile_m
    grid = (pl.cdiv(M, tm),)

    weights = (fused_params["wa"], fused_params["ba"],
               fused_params["wf"], fused_params["bf"],
               fused_params["wm"], fused_params["bm"])
    Hp = fused_params["hidden_padded"]

    # Hardware-derived VMEM budget, never above physical VMEM minus headroom.
    try:
        vmem_cap = int(pltpu.get_tpu_info().vmem_capacity_bytes)
    except Exception:
        vmem_cap = 64 * 1024 * 1024          # conservative (v7x per-TC) fallback
    weight_bytes = sum(int(w.size) * w.dtype.itemsize for w in weights)
    tile_bytes = 4 * tm * (4 * H + 6 * Hp)   # double-buffered x/out tiles + f32 temps
    vmem_limit = 2 * weight_bytes + tile_bytes + (4 << 20)  # 2x in case weights
    #                                   fall back to the double-buffered path.
    vmem_limit = int(min(max(vmem_limit, 32 << 20), vmem_cap - (8 << 20)))

    def build(single_buffer_weights):
        def wspec(shape):
            index_map = lambda i: (0,) * len(shape)
            if single_buffer_weights and hasattr(pl, "Buffered"):
                # Constant index_map => block never changes; one buffer suffices.
                return pl.BlockSpec(shape, index_map, pipeline_mode=pl.Buffered(1))
            return pl.BlockSpec(shape, index_map)

        return pl.pallas_call(
            _emotion_kernel,
            out_shape=jax.ShapeDtypeStruct((M, H), hidden_states.dtype),
            grid_spec=pltpu.PrefetchScalarGridSpec(
                num_scalar_prefetch=0,
                grid=grid,
                in_specs=[pl.BlockSpec((tm, H), lambda i: (i, 0))]
                         + [wspec(tuple(w.shape)) for w in weights],
                out_specs=pl.BlockSpec((tm, H), lambda i: (i, 0)),
            ),
            compiler_params=pltpu.CompilerParams(
                dimension_semantics=("parallel",),
                vmem_limit_bytes=vmem_limit,
            ),
        )

    try:
        out = build(single_buffer_weights=True)(x, *weights)
    except Exception:
        # pipeline_mode=pl.Buffered(1) not supported by this JAX/Mosaic build;
        # fall back to default (double-buffered) weight specs.
        out = build(single_buffer_weights=False)(x, *weights)

    return out.reshape(B, S, H)


def init_params(key, hidden_size):
    """Deterministic init mimicking PyTorch nn.Linear default (uniform +-1/sqrt(in))."""
    ks = jax.random.split(key, 6)
    bound = 1.0 / math.sqrt(hidden_size)

    def u(k, shape):
        return jax.random.uniform(k, shape, jnp.float32, -bound, bound)

    return {
        # analyzer: torch weight (8, H) stored transposed as (H, 8)
        "wa": u(ks[0], (hidden_size, NUM_EMOTIONS)),
        "ba": u(ks[1], (1, NUM_EMOTIONS)),
        # 8 amplifiers: each stored as (H_in, H_out)
        "we": u(ks[2], (NUM_EMOTIONS, hidden_size, hidden_size)),
        "be": u(ks[3], (NUM_EMOTIONS, hidden_size)),
        # mixer
        "wm": u(ks[4], (hidden_size, hidden_size)),
        "bm": u(ks[5], (1, hidden_size)),
    }


def reference_forward(hidden_states, params):
    """Pure-JAX (f32) reference mirroring the PyTorch forward."""
    x = hidden_states.astype(jnp.float32)
    scores = jax.nn.softmax(x @ params["wa"] + params["ba"], axis=-1)     # (B,S,8)
    combined = jnp.zeros_like(x)
    for i in range(NUM_EMOTIONS):
        amp = x @ params["we"][i] + params["be"][i]
        combined = combined + scores[..., i:i + 1] * amp
    return combined @ params["wm"] + params["bm"]


if __name__ == "__main__":
    key = jax.random.PRNGKey(0)
    k_param, k_input = jax.random.split(key)

    B, S, H = 2, 8, 32
    params = init_params(k_param, H)
    fused_params = prepare_fused_params(params)
    hidden_states = jax.random.normal(k_input, (B, S, H), jnp.float32)

    ref = reference_forward(hidden_states, params)

    # Single-tile run (tm = M) and a multi-step grid run (tm = 8, grid = 2).
    out = jax.block_until_ready(emotional_manipulator_forward(hidden_states, fused_params))
    out_tiled = jax.block_until_ready(
        emotional_manipulator_forward(hidden_states, fused_params, tile_m=8))

    assert out.shape == (B, S, H)
    # Tolerance reflects bf16 MXU inputs (f32 accumulation) + EUP approx reciprocal.
    err = float(jnp.max(jnp.abs(out - ref)))
    assert jnp.allclose(out, ref, atol=3e-2, rtol=3e-2), f"mismatch vs reference (max abs err {err})"
    err2 = float(jnp.max(jnp.abs(out_tiled - ref)))
    assert jnp.allclose(out_tiled, ref, atol=3e-2, rtol=3e-2), f"tiled mismatch (max abs err {err2})"

    print("KERNEL_OK")
</pallas_src>

<mosaic_0001>
module attributes {stable_mosaic.version = 11 : i64} {
  func.func @_emotion_kernel(%arg0: i32, %arg1: memref<16x32xf32, #tpu.memory_space<vmem>>, %arg2: memref<32x128xbf16, #tpu.memory_space<vmem>>, %arg3: memref<1x128xf32, #tpu.memory_space<vmem>>, %arg4: memref<8x32x128xbf16, #tpu.memory_space<vmem>>, %arg5: memref<8x1x128xf32, #tpu.memory_space<vmem>>, %arg6: memref<128x32xbf16, #tpu.memory_space<vmem>>, %arg7: memref<1x32xf32, #tpu.memory_space<vmem>>, %arg8: memref<16x32xf32, #tpu.memory_space<vmem>>) attributes {dimension_semantics = [#tpu.dimension_semantics<parallel>], iteration_bounds = array<i64: 1>, scalar_prefetch = 0 : i64, scratch_operands = 0 : i64, tpu.core_type = #tpu.core_type<tc>, window_params = [{transform_indices = @transform_0, window_bounds = array<i64: 16, 32>}, {pipeline_mode = #tpu.pipeline_mode<synchronous>, transform_indices = @transform_1, window_bounds = array<i64: 32, 128>}, {pipeline_mode = #tpu.pipeline_mode<synchronous>, transform_indices = @transform_2, window_bounds = array<i64: 1, 128>}, {pipeline_mode = #tpu.pipeline_mode<synchronous>, transform_indices = @transform_3, window_bounds = array<i64: 8, 32, 128>}, {pipeline_mode = #tpu.pipeline_mode<synchronous>, transform_indices = @transform_4, window_bounds = array<i64: 8, 1, 128>}, {pipeline_mode = #tpu.pipeline_mode<synchronous>, transform_indices = @transform_5, window_bounds = array<i64: 128, 32>}, {pipeline_mode = #tpu.pipeline_mode<synchronous>, transform_indices = @transform_6, window_bounds = array<i64: 1, 32>}, {transform_indices = @transform_7, window_bounds = array<i64: 16, 32>}]} {
    %c0 = arith.constant 0 : index
    %c0_0 = arith.constant 0 : index
    %0 = vector.load %arg1[%c0, %c0_0] : memref<16x32xf32, #tpu.memory_space<vmem>>, vector<16x32xf32>
    %1 = arith.truncf %0 : vector<16x32xf32> to vector<16x32xbf16>
    %c0_1 = arith.constant 0 : index
    %c0_2 = arith.constant 0 : index
    %2 = vector.load %arg2[%c0_1, %c0_2] : memref<32x128xbf16, #tpu.memory_space<vmem>>, vector<32x128xbf16>
    %cst = arith.constant dense<0.000000e+00> : vector<16x128xf32>
    %3 = tpu.matmul %1, %2, %cst {dimension_numbers = #tpu.dot_dimension_numbers<[1], [0], [0], [1], [0, 0, 1, 1], [], []>} : vector<16x32xbf16>, vector<32x128xbf16>, vector<16x128xf32> -> vector<16x128xf32>
    %c0_3 = arith.constant 0 : index
    %c0_4 = arith.constant 0 : index
    %4 = vector.load %arg3[%c0_3, %c0_4] : memref<1x128xf32, #tpu.memory_space<vmem>>, vector<1x128xf32>
    %5 = vector.broadcast %4 : vector<1x128xf32> to vector<16x128xf32>
    %6 = arith.addf %3, %5 : vector<16x128xf32>
    %cst_5 = arith.constant dense<0xFF800000> : vector<16xf32>
    %7 = vector.multi_reduction <maximumf>, %6, %cst_5 [1] : vector<16x128xf32> to vector<16xf32>
    %8 = vector.shape_cast %7 : vector<16xf32> to vector<16x1xf32>
    %9 = vector.broadcast %8 : vector<16x1xf32> to vector<16x128xf32>
    %10 = arith.subf %6, %9 : vector<16x128xf32>
    %11 = math.exp %10 : vector<16x128xf32>
    %cst_6 = arith.constant dense<0.000000e+00> : vector<16xf32>
    %12 = vector.multi_reduction <add>, %11, %cst_6 [1] : vector<16x128xf32> to vector<16xf32>
    %13 = vector.shape_cast %12 : vector<16xf32> to vector<16x1xf32>
    %14 = tpu.reciprocal %13 {approx = true} : vector<16x1xf32> -> vector<16x1xf32>
    %15 = vector.broadcast %14 : vector<16x1xf32> to vector<16x128xf32>
    %16 = arith.mulf %11, %15 : vector<16x128xf32>
    %c0_7 = arith.constant 0 : index
    %c0_8 = arith.constant 0 : index
    %c0_9 = arith.constant 0 : index
    %17 = vector.load %arg4[%c0_7, %c0_8, %c0_9] : memref<8x32x128xbf16, #tpu.memory_space<vmem>>, vector<1x32x128xbf16>
    %18 = vector.shape_cast %17 : vector<1x32x128xbf16> to vector<32x128xbf16>
    %cst_10 = arith.constant dense<0.000000e+00> : vector<16x128xf32>
    %19 = tpu.matmul %1, %18, %cst_10 {dimension_numbers = #tpu.dot_dimension_numbers<[1], [0], [0], [1], [0, 0, 1, 1], [], []>} : vector<16x32xbf16>, vector<32x128xbf16>, vector<16x128xf32> -> vector<16x128xf32>
    %c0_11 = arith.constant 0 : index
    %c0_12 = arith.constant 0 : index
    %c0_13 = arith.constant 0 : index
    %20 = vector.load %arg5[%c0_11, %c0_12, %c0_13] : memref<8x1x128xf32, #tpu.memory_space<vmem>>, vector<1x1x128xf32>
    %21 = vector.shape_cast %20 : vector<1x1x128xf32> to vector<1x128xf32>
    %22 = vector.broadcast %21 : vector<1x128xf32> to vector<16x128xf32>
    %23 = arith.addf %19, %22 : vector<16x128xf32>
    %24 = vector.extract_strided_slice %16 {offsets = [0, 0], sizes = [16, 1], strides = [1, 1]} : vector<16x128xf32> to vector<16x1xf32>
    %25 = vector.broadcast %24 : vector<16x1xf32> to vector<16x128xf32>
    %26 = arith.mulf %25, %23 : vector<16x128xf32>
    %c1 = arith.constant 1 : index
    %c0_14 = arith.constant 0 : index
    %c0_15 = arith.constant 0 : index
    %27 = vector.load %arg4[%c1, %c0_14, %c0_15] : memref<8x32x128xbf16, #tpu.memory_space<vmem>>, vector<1x32x128xbf16>
    %28 = vector.shape_cast %27 : vector<1x32x128xbf16> to vector<32x128xbf16>
    %cst_16 = arith.constant dense<0.000000e+00> : vector<16x128xf32>
    %29 = tpu.matmul %1, %28, %cst_16 {dimension_numbers = #tpu.dot_dimension_numbers<[1], [0], [0], [1], [0, 0, 1, 1], [], []>} : vector<16x32xbf16>, vector<32x128xbf16>, vector<16x128xf32> -> vector<16x128xf32>
    %c1_17 = arith.constant 1 : index
    %c0_18 = arith.constant 0 : index
    %c0_19 = arith.constant 0 : index
    %30 = vector.load %arg5[%c1_17, %c0_18, %c0_19] : memref<8x1x128xf32, #tpu.memory_space<vmem>>, vector<1x1x128xf32>
    %31 = vector.shape_cast %30 : vector<1x1x128xf32> to vector<1x128xf32>
    %32 = vector.broadcast %31 : vector<1x128xf32> to vector<16x128xf32>
    %33 = arith.addf %29, %32 : vector<16x128xf32>
    %34 = vector.extract_strided_slice %16 {offsets = [0, 1], sizes = [16, 1], strides = [1, 1]} : vector<16x128xf32> to vector<16x1xf32>
    %35 = vector.broadcast %34 : vector<16x1xf32> to vector<16x128xf32>
    %36 = arith.mulf %35, %33 : vector<16x128xf32>
    %37 = arith.addf %26, %36 : vector<16x128xf32>
    %c2 = arith.constant 2 : index
    %c0_20 = arith.constant 0 : index
    %c0_21 = arith.constant 0 : index
    %38 = vector.load %arg4[%c2, %c0_20, %c0_21] : memref<8x32x128xbf16, #tpu.memory_space<vmem>>, vector<1x32x128xbf16>
    %39 = vector.shape_cast %38 : vector<1x32x128xbf16> to vector<32x128xbf16>
    %cst_22 = arith.constant dense<0.000000e+00> : vector<16x128xf32>
    %40 = tpu.matmul %1, %39, %cst_22 {dimension_numbers = #tpu.dot_dimension_numbers<[1], [0], [0], [1], [0, 0, 1, 1], [], []>} : vector<16x32xbf16>, vector<32x128xbf16>, vector<16x128xf32> -> vector<16x128xf32>
    %c2_23 = arith.constant 2 : index
    %c0_24 = arith.constant 0 : index
    %c0_25 = arith.constant 0 : index
    %41 = vector.load %arg5[%c2_23, %c0_24, %c0_25] : memref<8x1x128xf32, #tpu.memory_space<vmem>>, vector<1x1x128xf32>
    %42 = vector.shape_cast %41 : vector<1x1x128xf32> to vector<1x128xf32>
    %43 = vector.broadcast %42 : vector<1x128xf32> to vector<16x128xf32>
    %44 = arith.addf %40, %43 : vector<16x128xf32>
    %45 = vector.extract_strided_slice %16 {offsets = [0, 2], sizes = [16, 1], strides = [1, 1]} : vector<16x128xf32> to vector<16x1xf32>
    %46 = vector.broadcast %45 : vector<16x1xf32> to vector<16x128xf32>
    %47 = arith.mulf %46, %44 : vector<16x128xf32>
    %48 = arith.addf %37, %47 : vector<16x128xf32>
    %c3 = arith.constant 3 : index
    %c0_26 = arith.constant 0 : index
    %c0_27 = arith.constant 0 : index
    %49 = vector.load %arg4[%c3, %c0_26, %c0_27] : memref<8x32x128xbf16, #tpu.memory_space<vmem>>, vector<1x32x128xbf16>
    %50 = vector.shape_cast %49 : vector<1x32x128xbf16> to vector<32x128xbf16>
    %cst_28 = arith.constant dense<0.000000e+00> : vector<16x128xf32>
    %51 = tpu.matmul %1, %50, %cst_28 {dimension_numbers = #tpu.dot_dimension_numbers<[1], [0], [0], [1], [0, 0, 1, 1], [], []>} : vector<16x32xbf16>, vector<32x128xbf16>, vector<16x128xf32> -> vector<16x128xf32>
    %c3_29 = arith.constant 3 : index
    %c0_30 = arith.constant 0 : index
    %c0_31 = arith.constant 0 : index
    %52 = vector.load %arg5[%c3_29, %c0_30, %c0_31] : memref<8x1x128xf32, #tpu.memory_space<vmem>>, vector<1x1x128xf32>
    %53 = vector.shape_cast %52 : vector<1x1x128xf32> to vector<1x128xf32>
    %54 = vector.broadcast %53 : vector<1x128xf32> to vector<16x128xf32>
    %55 = arith.addf %51, %54 : vector<16x128xf32>
    %56 = vector.extract_strided_slice %16 {offsets = [0, 3], sizes = [16, 1], strides = [1, 1]} : vector<16x128xf32> to vector<16x1xf32>
    %57 = vector.broadcast %56 : vector<16x1xf32> to vector<16x128xf32>
    %58 = arith.mulf %57, %55 : vector<16x128xf32>
    %59 = arith.addf %48, %58 : vector<16x128xf32>
    %c4 = arith.constant 4 : index
    %c0_32 = arith.constant 0 : index
    %c0_33 = arith.constant 0 : index
    %60 = vector.load %arg4[%c4, %c0_32, %c0_33] : memref<8x32x128xbf16, #tpu.memory_space<vmem>>, vector<1x32x128xbf16>
    %61 = vector.shape_cast %60 : vector<1x32x128xbf16> to vector<32x128xbf16>
    %cst_34 = arith.constant dense<0.000000e+00> : vector<16x128xf32>
    %62 = tpu.matmul %1, %61, %cst_34 {dimension_numbers = #tpu.dot_dimension_numbers<[1], [0], [0], [1], [0, 0, 1, 1], [], []>} : vector<16x32xbf16>, vector<32x128xbf16>, vector<16x128xf32> -> vector<16x128xf32>
    %c4_35 = arith.constant 4 : index
    %c0_36 = arith.constant 0 : index
    %c0_37 = arith.constant 0 : index
    %63 = vector.load %arg5[%c4_35, %c0_36, %c0_37] : memref<8x1x128xf32, #tpu.memory_space<vmem>>, vector<1x1x128xf32>
    %64 = vector.shape_cast %63 : vector<1x1x128xf32> to vector<1x128xf32>
    %65 = vector.broadcast %64 : vector<1x128xf32> to vector<16x128xf32>
    %66 = arith.addf %62, %65 : vector<16x128xf32>
    %67 = vector.extract_strided_slice %16 {offsets = [0, 4], sizes = [16, 1], strides = [1, 1]} : vector<16x128xf32> to vector<16x1xf32>
    %68 = vector.broadcast %67 : vector<16x1xf32> to vector<16x128xf32>
    %69 = arith.mulf %68, %66 : vector<16x128xf32>
    %70 = arith.addf %59, %69 : vector<16x128xf32>
    %c5 = arith.constant 5 : index
    %c0_38 = arith.constant 0 : index
    %c0_39 = arith.constant 0 : index
    %71 = vector.load %arg4[%c5, %c0_38, %c0_39] : memref<8x32x128xbf16, #tpu.memory_space<vmem>>, vector<1x32x128xbf16>
    %72 = vector.shape_cast %71 : vector<1x32x128xbf16> to vector<32x128xbf16>
    %cst_40 = arith.constant dense<0.000000e+00> : vector<16x128xf32>
    %73 = tpu.matmul %1, %72, %cst_40 {dimension_numbers = #tpu.dot_dimension_numbers<[1], [0], [0], [1], [0, 0, 1, 1], [], []>} : vector<16x32xbf16>, vector<32x128xbf16>, vector<16x128xf32> -> vector<16x128xf32>
    %c5_41 = arith.constant 5 : index
    %c0_42 = arith.constant 0 : index
    %c0_43 = arith.constant 0 : index
    %74 = vector.load %arg5[%c5_41, %c0_42, %c0_43] : memref<8x1x128xf32, #tpu.memory_space<vmem>>, vector<1x1x128xf32>
    %75 = vector.shape_cast %74 : vector<1x1x128xf32> to vector<1x128xf32>
    %76 = vector.broadcast %75 : vector<1x128xf32> to vector<16x128xf32>
    %77 = arith.addf %73, %76 : vector<16x128xf32>
    %78 = vector.extract_strided_slice %16 {offsets = [0, 5], sizes = [16, 1], strides = [1, 1]} : vector<16x128xf32> to vector<16x1xf32>
    %79 = vector.broadcast %78 : vector<16x1xf32> to vector<16x128xf32>
    %80 = arith.mulf %79, %77 : vector<16x128xf32>
    %81 = arith.addf %70, %80 : vector<16x128xf32>
    %c6 = arith.constant 6 : index
    %c0_44 = arith.constant 0 : index
    %c0_45 = arith.constant 0 : index
    %82 = vector.load %arg4[%c6, %c0_44, %c0_45] : memref<8x32x128xbf16, #tpu.memory_space<vmem>>, vector<1x32x128xbf16>
    %83 = vector.shape_cast %82 : vector<1x32x128xbf16> to vector<32x128xbf16>
    %cst_46 = arith.constant dense<0.000000e+00> : vector<16x128xf32>
    %84 = tpu.matmul %1, %83, %cst_46 {dimension_numbers = #tpu.dot_dimension_numbers<[1], [0], [0], [1], [0, 0, 1, 1], [], []>} : vector<16x32xbf16>, vector<32x128xbf16>, vector<16x128xf32> -> vector<16x128xf32>
    %c6_47 = arith.constant 6 : index
    %c0_48 = arith.constant 0 : index
    %c0_49 = arith.constant 0 : index
    %85 = vector.load %arg5[%c6_47, %c0_48, %c0_49] : memref<8x1x128xf32, #tpu.memory_space<vmem>>, vector<1x1x128xf32>
    %86 = vector.shape_cast %85 : vector<1x1x128xf32> to vector<1x128xf32>
    %87 = vector.broadcast %86 : vector<1x128xf32> to vector<16x128xf32>
    %88 = arith.addf %84, %87 : vector<16x128xf32>
    %89 = vector.extract_strided_slice %16 {offsets = [0, 6], sizes = [16, 1], strides = [1, 1]} : vector<16x128xf32> to vector<16x1xf32>
    %90 = vector.broadcast %89 : vector<16x1xf32> to vector<16x128xf32>
    %91 = arith.mulf %90, %88 : vector<16x128xf32>
    %92 = arith.addf %81, %91 : vector<16x128xf32>
    %c7 = arith.constant 7 : index
    %c0_50 = arith.constant 0 : index
    %c0_51 = arith.constant 0 : index
    %93 = vector.load %arg4[%c7, %c0_50, %c0_51] : memref<8x32x128xbf16, #tpu.memory_space<vmem>>, vector<1x32x128xbf16>
    %94 = vector.shape_cast %93 : vector<1x32x128xbf16> to vector<32x128xbf16>
    %cst_52 = arith.constant dense<0.000000e+00> : vector<16x128xf32>
    %95 = tpu.matmul %1, %94, %cst_52 {dimension_numbers = #tpu.dot_dimension_numbers<[1], [0], [0], [1], [0, 0, 1, 1], [], []>} : vector<16x32xbf16>, vector<32x128xbf16>, vector<16x128xf32> -> vector<16x128xf32>
    %c7_53 = arith.constant 7 : index
    %c0_54 = arith.constant 0 : index
    %c0_55 = arith.constant 0 : index
    %96 = vector.load %arg5[%c7_53, %c0_54, %c0_55] : memref<8x1x128xf32, #tpu.memory_space<vmem>>, vector<1x1x128xf32>
    %97 = vector.shape_cast %96 : vector<1x1x128xf32> to vector<1x128xf32>
    %98 = vector.broadcast %97 : vector<1x128xf32> to vector<16x128xf32>
    %99 = arith.addf %95, %98 : vector<16x128xf32>
    %100 = vector.extract_strided_slice %16 {offsets = [0, 7], sizes = [16, 1], strides = [1, 1]} : vector<16x128xf32> to vector<16x1xf32>
    %101 = vector.broadcast %100 : vector<16x1xf32> to vector<16x128xf32>
    %102 = arith.mulf %101, %99 : vector<16x128xf32>
    %103 = arith.addf %92, %102 : vector<16x128xf32>
    %104 = arith.truncf %103 : vector<16x128xf32> to vector<16x128xbf16>
    %c0_56 = arith.constant 0 : index
    %c0_57 = arith.constant 0 : index
    %105 = vector.load %arg6[%c0_56, %c0_57] : memref<128x32xbf16, #tpu.memory_space<vmem>>, vector<128x32xbf16>
    %cst_58 = arith.constant dense<0.000000e+00> : vector<16x32xf32>
    %106 = tpu.matmul %104, %105, %cst_58 {dimension_numbers = #tpu.dot_dimension_numbers<[1], [0], [0], [1], [0, 0, 1, 1], [], []>} : vector<16x128xbf16>, vector<128x32xbf16>, vector<16x32xf32> -> vector<16x32xf32>
    %c0_59 = arith.constant 0 : index
    %c0_60 = arith.constant 0 : index
    %107 = vector.load %arg7[%c0_59, %c0_60] : memref<1x32xf32, #tpu.memory_space<vmem>>, vector<1x32xf32>
    %108 = vector.broadcast %107 : vector<1x32xf32> to vector<16x32xf32>
    %109 = arith.addf %106, %108 : vector<16x32xf32>
    %c0_61 = arith.constant 0 : index
    %c0_62 = arith.constant 0 : index
    %110 = vector.load %arg8[%c0_61, %c0_62] : memref<16x32xf32, #tpu.memory_space<vmem>>, vector<16x32xf32>
    tpu.vector_store %arg8[%c0_61, %c0_62], %109 {strides = array<i32>} : memref<16x32xf32, #tpu.memory_space<vmem>>, vector<16x32xf32>,
    return
  }
  func.func @transform_0(%arg0: i32) -> (i32, i32) {
    %c0_i32 = arith.constant 0 : i32
    %c0_i32_0 = arith.constant 0 : i32
    return %arg0, %c0_i32 : i32, i32
  }
  func.func @transform_1(%arg0: i32) -> (i32, i32) {
    %c0_i32 = arith.constant 0 : i32
    %c0_i32_0 = arith.constant 0 : i32
    %c0_i32_1 = arith.constant 0 : i32
    return %c0_i32, %c0_i32_0 : i32, i32
  }
  func.func @transform_2(%arg0: i32) -> (i32, i32) {
    %c0_i32 = arith.constant 0 : i32
    %c0_i32_0 = arith.constant 0 : i32
    %c0_i32_1 = arith.constant 0 : i32
    return %c0_i32, %c0_i32_0 : i32, i32
  }
  func.func @transform_3(%arg0: i32) -> (i32, i32, i32) {
    %c0_i32 = arith.constant 0 : i32
    %c0_i32_0 = arith.constant 0 : i32
    %c0_i32_1 = arith.constant 0 : i32
    %c0_i32_2 = arith.constant 0 : i32
    return %c0_i32, %c0_i32_0, %c0_i32_1 : i32, i32, i32
  }
  func.func @transform_4(%arg0: i32) -> (i32, i32, i32) {
    %c0_i32 = arith.constant 0 : i32
    %c0_i32_0 = arith.constant 0 : i32
    %c0_i32_1 = arith.constant 0 : i32
    %c0_i32_2 = arith.constant 0 : i32
    return %c0_i32, %c0_i32_0, %c0_i32_1 : i32, i32, i32
  }
  func.func @transform_5(%arg0: i32) -> (i32, i32) {
    %c0_i32 = arith.constant 0 : i32
    %c0_i32_0 = arith.constant 0 : i32
    %c0_i32_1 = arith.constant 0 : i32
    return %c0_i32, %c0_i32_0 : i32, i32
  }
  func.func @transform_6(%arg0: i32) -> (i32, i32) {
    %c0_i32 = arith.constant 0 : i32
    %c0_i32_0 = arith.constant 0 : i32
    %c0_i32_1 = arith.constant 0 : i32
    return %c0_i32, %c0_i32_0 : i32, i32
  }
  func.func @transform_7(%arg0: i32) -> (i32, i32) {
    %c0_i32 = arith.constant 0 : i32
    %c0_i32_0 = arith.constant 0 : i32
    return %arg0, %c0_i32 : i32, i32
  }
}

module attributes {stable_mosaic.version = 11 : i64} {
  func.func @_emotion_kernel(%arg0: i32, %arg1: memref<16x32xf32, #tpu.memory_space<vmem>>, %arg2: memref<32x128xbf16, #tpu.memory_space<vmem>>, %arg3: memref<1x128xf32, #tpu.memory_space<vmem>>, %arg4: memref<8x32x128xbf16, #tpu.memory_space<vmem>>, %arg5: memref<8x1x128xf32, #tpu.memory_space<vmem>>, %arg6: memref<128x32xbf16, #tpu.memory_space<vmem>>, %arg7: memref<1x32xf32, #tpu.memory_space<vmem>>, %arg8: memref<16x32xf32, #tpu.memory_space<vmem>>) attributes {dimension_semantics = [#tpu.dimension_semantics<parallel>], iteration_bounds = array<i64: 1>, scalar_prefetch = 0 : i64, scratch_operands = 0 : i64, tpu.core_type = #tpu.core_type<tc>, window_params = [{transform_indices = @transform_0, window_bounds = array<i64: 16, 32>}, {pipeline_mode = #tpu.pipeline_mode<synchronous>, transform_indices = @transform_1, window_bounds = array<i64: 32, 128>}, {pipeline_mode = #tpu.pipeline_mode<synchronous>, transform_indices = @transform_2, window_bounds = array<i64: 1, 128>}, {pipeline_mode = #tpu.pipeline_mode<synchronous>, transform_indices = @transform_3, window_bounds = array<i64: 8, 32, 128>}, {pipeline_mode = #tpu.pipeline_mode<synchronous>, transform_indices = @transform_4, window_bounds = array<i64: 8, 1, 128>}, {pipeline_mode = #tpu.pipeline_mode<synchronous>, transform_indices = @transform_5, window_bounds = array<i64: 128, 32>}, {pipeline_mode = #tpu.pipeline_mode<synchronous>, transform_indices = @transform_6, window_bounds = array<i64: 1, 32>}, {transform_indices = @transform_7, window_bounds = array<i64: 16, 32>}]} {
    %c0 = arith.constant 0 : index
    %c0_0 = arith.constant 0 : index
    %0 = vector.load %arg1[%c0, %c0_0] : memref<16x32xf32, #tpu.memory_space<vmem>>, vector<16x32xf32>
    %1 = arith.truncf %0 : vector<16x32xf32> to vector<16x32xbf16>
    %c0_1 = arith.constant 0 : index
    %c0_2 = arith.constant 0 : index
    %2 = vector.load %arg2[%c0_1, %c0_2] : memref<32x128xbf16, #tpu.memory_space<vmem>>, vector<32x128xbf16>
    %cst = arith.constant dense<0.000000e+00> : vector<16x128xf32>
    %3 = tpu.matmul %1, %2, %cst {dimension_numbers = #tpu.dot_dimension_numbers<[1], [0], [0], [1], [0, 0, 1, 1], [], []>} : vector<16x32xbf16>, vector<32x128xbf16>, vector<16x128xf32> -> vector<16x128xf32>
    %c0_3 = arith.constant 0 : index
    %c0_4 = arith.constant 0 : index
    %4 = vector.load %arg3[%c0_3, %c0_4] : memref<1x128xf32, #tpu.memory_space<vmem>>, vector<1x128xf32>
    %5 = vector.broadcast %4 : vector<1x128xf32> to vector<16x128xf32>
    %6 = arith.addf %3, %5 : vector<16x128xf32>
    %cst_5 = arith.constant dense<0xFF800000> : vector<16xf32>
    %7 = vector.multi_reduction <maximumf>, %6, %cst_5 [1] : vector<16x128xf32> to vector<16xf32>
    %8 = vector.shape_cast %7 : vector<16xf32> to vector<16x1xf32>
    %9 = vector.broadcast %8 : vector<16x1xf32> to vector<16x128xf32>
    %10 = arith.subf %6, %9 : vector<16x128xf32>
    %11 = math.exp %10 : vector<16x128xf32>
    %cst_6 = arith.constant dense<0.000000e+00> : vector<16xf32>
    %12 = vector.multi_reduction <add>, %11, %cst_6 [1] : vector<16x128xf32> to vector<16xf32>
    %13 = vector.shape_cast %12 : vector<16xf32> to vector<16x1xf32>
    %14 = tpu.reciprocal %13 {approx = true} : vector<16x1xf32> -> vector<16x1xf32>
    %15 = vector.broadcast %14 : vector<16x1xf32> to vector<16x128xf32>
    %16 = arith.mulf %11, %15 : vector<16x128xf32>
    %c0_7 = arith.constant 0 : index
    %c0_8 = arith.constant 0 : index
    %c0_9 = arith.constant 0 : index
    %17 = vector.load %arg4[%c0_7, %c0_8, %c0_9] : memref<8x32x128xbf16, #tpu.memory_space<vmem>>, vector<1x32x128xbf16>
    %18 = vector.shape_cast %17 : vector<1x32x128xbf16> to vector<32x128xbf16>
    %cst_10 = arith.constant dense<0.000000e+00> : vector<16x128xf32>
    %19 = tpu.matmul %1, %18, %cst_10 {dimension_numbers = #tpu.dot_dimension_numbers<[1], [0], [0], [1], [0, 0, 1, 1], [], []>} : vector<16x32xbf16>, vector<32x128xbf16>, vector<16x128xf32> -> vector<16x128xf32>
    %c0_11 = arith.constant 0 : index
    %c0_12 = arith.constant 0 : index
    %c0_13 = arith.constant 0 : index
    %20 = vector.load %arg5[%c0_11, %c0_12, %c0_13] : memref<8x1x128xf32, #tpu.memory_space<vmem>>, vector<1x1x128xf32>
    %21 = vector.shape_cast %20 : vector<1x1x128xf32> to vector<1x128xf32>
    %22 = vector.broadcast %21 : vector<1x128xf32> to vector<16x128xf32>
    %23 = arith.addf %19, %22 : vector<16x128xf32>
    %24 = vector.extract_strided_slice %16 {offsets = [0, 0], sizes = [16, 1], strides = [1, 1]} : vector<16x128xf32> to vector<16x1xf32>
    %25 = vector.broadcast %24 : vector<16x1xf32> to vector<16x128xf32>
    %26 = arith.mulf %25, %23 : vector<16x128xf32>
    %c1 = arith.constant 1 : index
    %c0_14 = arith.constant 0 : index
    %c0_15 = arith.constant 0 : index
    %27 = vector.load %arg4[%c1, %c0_14, %c0_15] : memref<8x32x128xbf16, #tpu.memory_space<vmem>>, vector<1x32x128xbf16>
    %28 = vector.shape_cast %27 : vector<1x32x128xbf16> to vector<32x128xbf16>
    %cst_16 = arith.constant dense<0.000000e+00> : vector<16x128xf32>
    %29 = tpu.matmul %1, %28, %cst_16 {dimension_numbers = #tpu.dot_dimension_numbers<[1], [0], [0], [1], [0, 0, 1, 1], [], []>} : vector<16x32xbf16>, vector<32x128xbf16>, vector<16x128xf32> -> vector<16x128xf32>
    %c1_17 = arith.constant 1 : index
    %c0_18 = arith.constant 0 : index
    %c0_19 = arith.constant 0 : index
    %30 = vector.load %arg5[%c1_17, %c0_18, %c0_19] : memref<8x1x128xf32, #tpu.memory_space<vmem>>, vector<1x1x128xf32>
    %31 = vector.shape_cast %30 : vector<1x1x128xf32> to vector<1x128xf32>
    %32 = vector.broadcast %31 : vector<1x128xf32> to vector<16x128xf32>
    %33 = arith.addf %29, %32 : vector<16x128xf32>
    %34 = vector.extract_strided_slice %16 {offsets = [0, 1], sizes = [16, 1], strides = [1, 1]} : vector<16x128xf32> to vector<16x1xf32>
    %35 = vector.broadcast %34 : vector<16x1xf32> to vector<16x128xf32>
    %36 = arith.mulf %35, %33 : vector<16x128xf32>
    %37 = arith.addf %26, %36 : vector<16x128xf32>
    %c2 = arith.constant 2 : index
    %c0_20 = arith.constant 0 : index
    %c0_21 = arith.constant 0 : index
    %38 = vector.load %arg4[%c2, %c0_20, %c0_21] : memref<8x32x128xbf16, #tpu.memory_space<vmem>>, vector<1x32x128xbf16>
    %39 = vector.shape_cast %38 : vector<1x32x128xbf16> to vector<32x128xbf16>
    %cst_22 = arith.constant dense<0.000000e+00> : vector<16x128xf32>
    %40 = tpu.matmul %1, %39, %cst_22 {dimension_numbers = #tpu.dot_dimension_numbers<[1], [0], [0], [1], [0, 0, 1, 1], [], []>} : vector<16x32xbf16>, vector<32x128xbf16>, vector<16x128xf32> -> vector<16x128xf32>
    %c2_23 = arith.constant 2 : index
    %c0_24 = arith.constant 0 : index
    %c0_25 = arith.constant 0 : index
    %41 = vector.load %arg5[%c2_23, %c0_24, %c0_25] : memref<8x1x128xf32, #tpu.memory_space<vmem>>, vector<1x1x128xf32>
    %42 = vector.shape_cast %41 : vector<1x1x128xf32> to vector<1x128xf32>
    %43 = vector.broadcast %42 : vector<1x128xf32> to vector<16x128xf32>
    %44 = arith.addf %40, %43 : vector<16x128xf32>
    %45 = vector.extract_strided_slice %16 {offsets = [0, 2], sizes = [16, 1], strides = [1, 1]} : vector<16x128xf32> to vector<16x1xf32>
    %46 = vector.broadcast %45 : vector<16x1xf32> to vector<16x128xf32>
    %47 = arith.mulf %46, %44 : vector<16x128xf32>
    %48 = arith.addf %37, %47 : vector<16x128xf32>
    %c3 = arith.constant 3 : index
    %c0_26 = arith.constant 0 : index
    %c0_27 = arith.constant 0 : index
    %49 = vector.load %arg4[%c3, %c0_26, %c0_27] : memref<8x32x128xbf16, #tpu.memory_space<vmem>>, vector<1x32x128xbf16>
    %50 = vector.shape_cast %49 : vector<1x32x128xbf16> to vector<32x128xbf16>
    %cst_28 = arith.constant dense<0.000000e+00> : vector<16x128xf32>
    %51 = tpu.matmul %1, %50, %cst_28 {dimension_numbers = #tpu.dot_dimension_numbers<[1], [0], [0], [1], [0, 0, 1, 1], [], []>} : vector<16x32xbf16>, vector<32x128xbf16>, vector<16x128xf32> -> vector<16x128xf32>
    %c3_29 = arith.constant 3 : index
    %c0_30 = arith.constant 0 : index
    %c0_31 = arith.constant 0 : index
    %52 = vector.load %arg5[%c3_29, %c0_30, %c0_31] : memref<8x1x128xf32, #tpu.memory_space<vmem>>, vector<1x1x128xf32>
    %53 = vector.shape_cast %52 : vector<1x1x128xf32> to vector<1x128xf32>
    %54 = vector.broadcast %53 : vector<1x128xf32> to vector<16x128xf32>
    %55 = arith.addf %51, %54 : vector<16x128xf32>
    %56 = vector.extract_strided_slice %16 {offsets = [0, 3], sizes = [16, 1], strides = [1, 1]} : vector<16x128xf32> to vector<16x1xf32>
    %57 = vector.broadcast %56 : vector<16x1xf32> to vector<16x128xf32>
    %58 = arith.mulf %57, %55 : vector<16x128xf32>
    %59 = arith.addf %48, %58 : vector<16x128xf32>
    %c4 = arith.constant 4 : index
    %c0_32 = arith.constant 0 : index
    %c0_33 = arith.constant 0 : index
    %60 = vector.load %arg4[%c4, %c0_32, %c0_33] : memref<8x32x128xbf16, #tpu.memory_space<vmem>>, vector<1x32x128xbf16>
    %61 = vector.shape_cast %60 : vector<1x32x128xbf16> to vector<32x128xbf16>
    %cst_34 = arith.constant dense<0.000000e+00> : vector<16x128xf32>
    %62 = tpu.matmul %1, %61, %cst_34 {dimension_numbers = #tpu.dot_dimension_numbers<[1], [0], [0], [1], [0, 0, 1, 1], [], []>} : vector<16x32xbf16>, vector<32x128xbf16>, vector<16x128xf32> -> vector<16x128xf32>
    %c4_35 = arith.constant 4 : index
    %c0_36 = arith.constant 0 : index
    %c0_37 = arith.constant 0 : index
    %63 = vector.load %arg5[%c4_35, %c0_36, %c0_37] : memref<8x1x128xf32, #tpu.memory_space<vmem>>, vector<1x1x128xf32>
    %64 = vector.shape_cast %63 : vector<1x1x128xf32> to vector<1x128xf32>
    %65 = vector.broadcast %64 : vector<1x128xf32> to vector<16x128xf32>
    %66 = arith.addf %62, %65 : vector<16x128xf32>
    %67 = vector.extract_strided_slice %16 {offsets = [0, 4], sizes = [16, 1], strides = [1, 1]} : vector<16x128xf32> to vector<16x1xf32>
    %68 = vector.broadcast %67 : vector<16x1xf32> to vector<16x128xf32>
    %69 = arith.mulf %68, %66 : vector<16x128xf32>
    %70 = arith.addf %59, %69 : vector<16x128xf32>
    %c5 = arith.constant 5 : index
    %c0_38 = arith.constant 0 : index
    %c0_39 = arith.constant 0 : index
    %71 = vector.load %arg4[%c5, %c0_38, %c0_39] : memref<8x32x128xbf16, #tpu.memory_space<vmem>>, vector<1x32x128xbf16>
    %72 = vector.shape_cast %71 : vector<1x32x128xbf16> to vector<32x128xbf16>
    %cst_40 = arith.constant dense<0.000000e+00> : vector<16x128xf32>
    %73 = tpu.matmul %1, %72, %cst_40 {dimension_numbers = #tpu.dot_dimension_numbers<[1], [0], [0], [1], [0, 0, 1, 1], [], []>} : vector<16x32xbf16>, vector<32x128xbf16>, vector<16x128xf32> -> vector<16x128xf32>
    %c5_41 = arith.constant 5 : index
    %c0_42 = arith.constant 0 : index
    %c0_43 = arith.constant 0 : index
    %74 = vector.load %arg5[%c5_41, %c0_42, %c0_43] : memref<8x1x128xf32, #tpu.memory_space<vmem>>, vector<1x1x128xf32>
    %75 = vector.shape_cast %74 : vector<1x1x128xf32> to vector<1x128xf32>
    %76 = vector.broadcast %75 : vector<1x128xf32> to vector<16x128xf32>
    %77 = arith.addf %73, %76 : vector<16x128xf32>
    %78 = vector.extract_strided_slice %16 {offsets = [0, 5], sizes = [16, 1], strides = [1, 1]} : vector<16x128xf32> to vector<16x1xf32>
    %79 = vector.broadcast %78 : vector<16x1xf32> to vector<16x128xf32>
    %80 = arith.mulf %79, %77 : vector<16x128xf32>
    %81 = arith.addf %70, %80 : vector<16x128xf32>
    %c6 = arith.constant 6 : index
    %c0_44 = arith.constant 0 : index
    %c0_45 = arith.constant 0 : index
    %82 = vector.load %arg4[%c6, %c0_44, %c0_45] : memref<8x32x128xbf16, #tpu.memory_space<vmem>>, vector<1x32x128xbf16>
    %83 = vector.shape_cast %82 : vector<1x32x128xbf16> to vector<32x128xbf16>
    %cst_46 = arith.constant dense<0.000000e+00> : vector<16x128xf32>
    %84 = tpu.matmul %1, %83, %cst_46 {dimension_numbers = #tpu.dot_dimension_numbers<[1], [0], [0], [1], [0, 0, 1, 1], [], []>} : vector<16x32xbf16>, vector<32x128xbf16>, vector<16x128xf32> -> vector<16x128xf32>
    %c6_47 = arith.constant 6 : index
    %c0_48 = arith.constant 0 : index
    %c0_49 = arith.constant 0 : index
    %85 = vector.load %arg5[%c6_47, %c0_48, %c0_49] : memref<8x1x128xf32, #tpu.memory_space<vmem>>, vector<1x1x128xf32>
    %86 = vector.shape_cast %85 : vector<1x1x128xf32> to vector<1x128xf32>
    %87 = vector.broadcast %86 : vector<1x128xf32> to vector<16x128xf32>
    %88 = arith.addf %84, %87 : vector<16x128xf32>
    %89 = vector.extract_strided_slice %16 {offsets = [0, 6], sizes = [16, 1], strides = [1, 1]} : vector<16x128xf32> to vector<16x1xf32>
    %90 = vector.broadcast %89 : vector<16x1xf32> to vector<16x128xf32>
    %91 = arith.mulf %90, %88 : vector<16x128xf32>
    %92 = arith.addf %81, %91 : vector<16x128xf32>
    %c7 = arith.constant 7 : index
    %c0_50 = arith.constant 0 : index
    %c0_51 = arith.constant 0 : index
    %93 = vector.load %arg4[%c7, %c0_50, %c0_51] : memref<8x32x128xbf16, #tpu.memory_space<vmem>>, vector<1x32x128xbf16>
    %94 = vector.shape_cast %93 : vector<1x32x128xbf16> to vector<32x128xbf16>
    %cst_52 = arith.constant dense<0.000000e+00> : vector<16x128xf32>
    %95 = tpu.matmul %1, %94, %cst_52 {dimension_numbers = #tpu.dot_dimension_numbers<[1], [0], [0], [1], [0, 0, 1, 1], [], []>} : vector<16x32xbf16>, vector<32x128xbf16>, vector<16x128xf32> -> vector<16x128xf32>
    %c7_53 = arith.constant 7 : index
    %c0_54 = arith.constant 0 : index
    %c0_55 = arith.constant 0 : index
    %96 = vector.load %arg5[%c7_53, %c0_54, %c0_55] : memref<8x1x128xf32, #tpu.memory_space<vmem>>, vector<1x1x128xf32>
    %97 = vector.shape_cast %96 : vector<1x1x128xf32> to vector<1x128xf32>
    %98 = vector.broadcast %97 : vector<1x128xf32> to vector<16x128xf32>
    %99 = arith.addf %95, %98 : vector<16x128xf32>
    %100 = vector.extract_strided_slice %16 {offsets = [0, 7], sizes = [16, 1], strides = [1, 1]} : vector<16x128xf32> to vector<16x1xf32>
    %101 = vector.broadcast %100 : vector<16x1xf32> to vector<16x128xf32>
    %102 = arith.mulf %101, %99 : vector<16x128xf32>
    %103 = arith.addf %92, %102 : vector<16x128xf32>
    %104 = arith.truncf %103 : vector<16x128xf32> to vector<16x128xbf16>
    %c0_56 = arith.constant 0 : index
    %c0_57 = arith.constant 0 : index
    %105 = vector.load %arg6[%c0_56, %c0_57] : memref<128x32xbf16, #tpu.memory_space<vmem>>, vector<128x32xbf16>
    %cst_58 = arith.constant dense<0.000000e+00> : vector<16x32xf32>
    %106 = tpu.matmul %104, %105, %cst_58 {dimension_numbers = #tpu.dot_dimension_numbers<[1], [0], [0], [1], [0, 0, 1, 1], [], []>} : vector<16x128xbf16>, vector<128x32xbf16>, vector<16x32xf32> -> vector<16x32xf32>
    %c0_59 = arith.constant 0 : index
    %c0_60 = arith.constant 0 : index
    %107 = vector.load %arg7[%c0_59, %c0_60] : memref<1x32xf32, #tpu.memory_space<vmem>>, vector<1x32xf32>
    %108 = vector.broadcast %107 : vector<1x32xf32> to vector<16x32xf32>
    %109 = arith.addf %106, %108 : vector<16x32xf32>
    %c0_61 = arith.constant 0 : index
    %c0_62 = arith.constant 0 : index
    %110 = vector.load %arg8[%c0_61, %c0_62] : memref<16x32xf32, #tpu.memory_space<vmem>>, vector<16x32xf32>
    tpu.vector_store %arg8[%c0_61, %c0_62], %109 {strides = array<i32>} : memref<16x32xf32, #tpu.memory_space<vmem>>, vector<16x32xf32>,
    return
  }
  func.func @transform_0(%arg0: i32) -> (i32, i32) {
    %c0_i32 = arith.constant 0 : i32
    %c0_i32_0 = arith.constant 0 : i32
    return %arg0, %c0_i32 : i32, i32
  }
  func.func @transform_1(%arg0: i32) -> (i32, i32) {
    %c0_i32 = arith.constant 0 : i32
    %c0_i32_0 = arith.constant 0 : i32
    %c0_i32_1 = arith.constant 0 : i32
    return %c0_i32, %c0_i32_0 : i32, i32
  }
  func.func @transform_2(%arg0: i32) -> (i32, i32) {
    %c0_i32 = arith.constant 0 : i32
    %c0_i32_0 = arith.constant 0 : i32
    %c0_i32_1 = arith.constant 0 : i32
    return %c0_i32, %c0_i32_0 : i32, i32
  }
  func.func @transform_3(%arg0: i32) -> (i32, i32, i32) {
    %c0_i32 = arith.constant 0 : i32
    %c0_i32_0 = arith.constant 0 : i32
    %c0_i32_1 = arith.constant 0 : i32
    %c0_i32_2 = arith.constant 0 : i32
    return %c0_i32, %c0_i32_0, %c0_i32_1 : i32, i32, i32
  }
  func.func @transform_4(%arg0: i32) -> (i32, i32, i32) {
    %c0_i32 = arith.constant 0 : i32
    %c0_i32_0 = arith.constant 0 : i32
    %c0_i32_1 = arith.constant 0 : i32
    %c0_i32_2 = arith.constant 0 : i32
    return %c0_i32, %c0_i32_0, %c0_i32_1 : i32, i32, i32
  }
  func.func @transform_5(%arg0: i32) -> (i32, i32) {
    %c0_i32 = arith.constant 0 : i32
    %c0_i32_0 = arith.constant 0 : i32
    %c0_i32_1 = arith.constant 0 : i32
    return %c0_i32, %c0_i32_0 : i32, i32
  }
  func.func @transform_6(%arg0: i32) -> (i32, i32) {
    %c0_i32 = arith.constant 0 : i32
    %c0_i32_0 = arith.constant 0 : i32
    %c0_i32_1 = arith.constant 0 : i32
    return %c0_i32, %c0_i32_0 : i32, i32
  }
  func.func @transform_7(%arg0: i32) -> (i32, i32) {
    %c0_i32 = arith.constant 0 : i32
    %c0_i32_0 = arith.constant 0 : i32
    return %arg0, %c0_i32 : i32, i32
  }
}

</mosaic_0001>

<llo_original>
// kernel: tpu_custom_call.1
$region0: #{tpu_custom_call.1}
  #allocation0 [shape = 'u32[]', space=smem, size = 0x4, offset = 0x4, fixed_abs, tag = 'smem constant byte address 0x4 - core index']
  #allocation1 [shape = 'u32[144,128]{1,0:T(1,128)}', space=vmem, size = 0x12000, scoped, tag = 'internal scratch']
  %s0 = inlined_call_operand.vmem [shape: f32[16,32], index: 0, kind: input, shape index: {}]
  %s1 = inlined_call_operand.vmem [shape: bf16[32,128], index: 1, kind: input, shape index: {}]
  %s2 = inlined_call_operand.vmem [shape: f32[1,128], index: 2, kind: input, shape index: {}]
  %s3 = inlined_call_operand.hbm [shape: bf16[8,32,128], index: 3, kind: input, shape index: {}]
  %s4 = inlined_call_operand.vmem [shape: f32[8,1,128], index: 4, kind: input, shape index: {}]
  %s5 = inlined_call_operand.vmem [shape: bf16[128,32], index: 5, kind: input, shape index: {}]
  %s6 = inlined_call_operand.vmem [shape: f32[1,32], index: 6, kind: input, shape index: {}]
  %s7 = inlined_call_operand.hbm [shape: f32[16,32], index: 7, kind: output, shape index: {}]
  %s8 = sld [smem:[#allocation0]]
  $region42: #{tpu_custom_call.1} parent=0
    _
  %s10 = ssub.s32 1, %s8
  %s11 = scalar_select 0, %s10, %s8
  $region1: #{tpu_custom_call.1} parent=0
    #allocation2 [shape = 'u8[65536]{0}', space=vmem, size = 0x10000, scoped, tag = 'input window, operand 3, single buffered']
    #allocation3 [shape = 's32[1]{0}', space=sflag, size = 0x4, scoped, tag = 'scoped memory for tpu_custom_call.1']
    #allocation4 [shape = 's32[1]{0}', space=sflag, size = 0x4, scoped, tag = 'scoped memory for tpu_custom_call.1']
    #allocation5 [shape = 'u8[8192]{0}', space=vmem, size = 0x2000, scoped, tag = 'output window, operand 0, single buffered']
    %12 = vsyncpa [#allocation3], 0
    %13 = vsyncpa [#allocation4], 0
    // Predicated region
    $region2: #{tpu_custom_call.1} parent=1 // pred_check
      _
    $region3: #{tpu_custom_call.1} parent=1 // pred_check_branch
      %15 = sbr.rel (0) target = $region5
    $region4: #{tpu_custom_call.1} parent=1 // pred_region
      _
    $region5: #{tpu_custom_call.1} parent=1 // pred_fallthru
      _
    // Predicated region
    $region6: #{tpu_custom_call.1} parent=1 // pred_check
      _
    $region7: #{tpu_custom_call.1} parent=1 // pred_check_branch
      %17 = sbr.rel (0) target = $region9
    $region8: #{tpu_custom_call.1} parent=1 // pred_region
      _
    $region9: #{tpu_custom_call.1} parent=1 // pred_fallthru
      _
    // Predicated region
    $region10: #{tpu_custom_call.1} parent=1 // pred_check
      _
    $region11: #{tpu_custom_call.1} parent=1 // pred_check_branch
      %19 = sbr.rel (0) target = $region13
    $region12: #{tpu_custom_call.1} parent=1 // pred_region
      _
    $region13: #{tpu_custom_call.1} parent=1 // pred_fallthru
      _
    // Predicated region
    $region14: #{tpu_custom_call.1} parent=1 // pred_check
      _
    $region15: #{tpu_custom_call.1} parent=1 // pred_check_branch
      %21 = sbr.rel (0) target = $region17
    $region16: #{tpu_custom_call.1} parent=1 // pred_region
      %s23 = ssub.s32 2048, 2048
      %24 = vsyncadd [#allocation3], %s23
      %s25 = sshll.u32 [#allocation2], 4
      %s26 = int_to_ptr.vmem [resolvable:$true] %s25
      %31 = dma.hbm_to_vmem [thread:$0]  %s3, 2048, %s26, [#allocation3], 64, 64, 4
    $region17: #{tpu_custom_call.1} parent=1 // pred_fallthru
      _
    // Predicated region
    $region18: #{tpu_custom_call.1} parent=1 // pred_check
      _
    $region19: #{tpu_custom_call.1} parent=1 // pred_check_branch
      %33 = sbr.rel (0) target = $region21
    $region20: #{tpu_custom_call.1} parent=1 // pred_region
      _
    $region21: #{tpu_custom_call.1} parent=1 // pred_fallthru
      _
    // Predicated region
    $region22: #{tpu_custom_call.1} parent=1 // pred_check
      _
    $region23: #{tpu_custom_call.1} parent=1 // pred_check_branch
      %35 = sbr.rel (0) target = $region25
    $region24: #{tpu_custom_call.1} parent=1 // pred_region
      _
    $region25: #{tpu_custom_call.1} parent=1 // pred_fallthru
      _
    // Predicated region
    $region26: #{tpu_custom_call.1} parent=1 // pred_check
      _
    $region27: #{tpu_custom_call.1} parent=1 // pred_check_branch
      %37 = sbr.rel (0) target = $region29
    $region28: #{tpu_custom_call.1} parent=1 // pred_region
      _
    $region29: #{tpu_custom_call.1} parent=1 // pred_fallthru
      _
    // Predicated region
    $region30: #{tpu_custom_call.1} parent=1 // pred_check
      _
    $region31: #{tpu_custom_call.1} parent=1 // pred_check_branch
      %39 = sbr.rel (0) target = $region33
    $region32: #{tpu_custom_call.1} parent=1 // pred_region
      %40 = dma.done [#allocation3], 2048
    $region33: #{tpu_custom_call.1} parent=1 // pred_fallthru
      _
    %v42 = vld [vmem:[%s0] sm:$0xff]
    %v43 = vld [vmem:[%s0 + $0x8] sm:$0xff]
    %v44 = vpack.c.bf16 %v43, %v42
    %v45 = vld [vmem:[%s1] sm:$0xf]
    %v46 = vld [vmem:[%s1 + $0x4] sm:$0xf]
    %v47 = vld [vmem:[%s1 + $0x8] sm:$0xf]
    %v48 = vld [vmem:[%s1 + $0xc] sm:$0xf]
    %v49 = vld [vmem:[%s2] sm:$0x1]
    %v51 = vlaneseq
    %v52 = vshrl.u32 %v51, 7
    %v53 = vsub.s32 0, %v52
    %v54 = vrot.slane %v49, %v53
    %v60 = vunpack.c.l.b16 %v45
    %v61 = vunpack.c.l.b16 %v46
    %v62 = vunpack.c.l.b16 %v47
    %v63 = vunpack.c.l.b16 %v48
    %v64 = vpack.c.b16 %v61, %v60
    %v65 = vpack.c.b16 %v63, %v62
    %vm68 = vcmask 261120
    %v70 = vsel %vm68, %v44, 0
    %72 = vmatprep.subr.bf16.mxu0 0
    %73 = vmatpush1.bf16.msra.mxu0 %v64
    %74 = vmatprep.subr.bf16.mxu0 0
    %75 = vmatpush1.bf16.msra.mxu0 %v65
    %76 = vmatprep.subr.bf16.mxu0 0
    %77 = vmatpush1.bf16.msra.mxu0 0
    %78 = vmatprep.subr.bf16.mxu0 0
    %79 = vmatpush1.bf16.msra.mxu0 0
    %80 = vmatprep.subr.bf16.mxu0 0
    %81 = vmatpush1.bf16.msra.mxu0 0
    %82 = vmatprep.subr.bf16.mxu0 0
    %83 = vmatpush1.bf16.msra.mxu0 0
    %84 = vmatprep.subr.bf16.mxu0 0
    %85 = vmatpush1.bf16.msra.mxu0 0
    %86 = vmatprep.subr.bf16.mxu0 0
    %87 = vmatpush1.bf16.msra.mxu0 0
    %88 = vmatprep.subr.bf16.mxu0 0
    %89 = vmatpush1.bf16.msra.mxu0 0
    %90 = vmatprep.subr.bf16.mxu0 0
    %91 = vmatpush1.bf16.msra.mxu0 0
    %92 = vmatprep.subr.bf16.mxu0 0
    %93 = vmatpush1.bf16.msra.mxu0 0
    %94 = vmatprep.subr.bf16.mxu0 0
    %95 = vmatpush1.bf16.msra.mxu0 0
    %96 = vmatprep.subr.bf16.mxu0 0
    %97 = vmatpush1.bf16.msra.mxu0 0
    %98 = vmatprep.subr.bf16.mxu0 0
    %99 = vmatpush1.bf16.msra.mxu0 0
    %100 = vmatprep.subr.bf16.mxu0 0
    %101 = vmatpush1.bf16.msra.mxu0 0
    %102 = vmatprep.subr.bf16.mxu0 0
    %103 = vmatpush1.bf16.msra.mxu0 0
    %104 = vmatprep.mubr.bf16.mxu0 0
    %105 = vmatmul.mubr.bf16.gmra.mrb[0].mxu0 %v70
    %v106 = vpop.f32.mrb[0].mxu0
    %v107 = vadd.f32 %v54, %v106
    %v108 = vpop.f32.mrb[0].mxu0
    %v109 = vpop.f32.mrb[0].mxu0
    %v110 = vadd.f32 %v54, %v109
    %v111 = vpop.f32.mrb[0].mxu0
    %112 = vdwg.mxu0
    %113 = vmax.xlane.f32.xlu0 %v107
    %v114 = vpop.xlane.xlu0 %113
    %115 = vmax.xlane.f32.xlu0 %v110
    %v116 = vpop.xlane.xlu0 %115
    %v117 = vsub.f32 %v107, %v114
    %v118 = vsub.f32 %v110, %v116
    %v119 = vmul.f32 %v117, 1.442695
    %v120 = vpow.pop %v119
    %v121 = vmul.f32 %v118, 1.442695
    %v122 = vpow.pop %v121
    %123 = vadd.xlane.f32.xlu0 %v120
    %v124 = vpop.xlane.xlu0 %123
    %125 = vadd.xlane.f32.xlu0 %v122
    %v126 = vpop.xlane.xlu0 %125
    %v127 = vrcp.pop %v124
    %v128 = vrcp.pop %v126
    %v129 = vmul.f32 %v120, %v127
    %v130 = vmul.f32 %v122, %v128
    %v131 = vld [vmem:[#allocation2] sm:$0xf]
    %v132 = vld [vmem:[#allocation2 + $0x4] sm:$0xf]
    %v133 = vld [vmem:[#allocation2 + $0x8] sm:$0xf]
    %v134 = vld [vmem:[#allocation2 + $0xc] sm:$0xf]
    %v135 = vld [vmem:[%s4] sm:$0x1]
    %v137 = vlaneseq
    %v138 = vshrl.u32 %v137, 7
    %v139 = vsub.s32 0, %v138
    %v140 = vrot.slane %v135, %v139
    %v146 = vunpack.c.l.b16 %v131
    %v147 = vunpack.c.l.b16 %v132
    %v148 = vunpack.c.l.b16 %v133
    %v149 = vunpack.c.l.b16 %v134
    %v150 = vpack.c.b16 %v147, %v146
    %v151 = vpack.c.b16 %v149, %v148
    %154 = vmatprep.subr.bf16.mxu0 0
    %155 = vmatpush1.bf16.msra.mxu0 %v150
    %156 = vmatprep.subr.bf16.mxu0 0
    %157 = vmatpush1.bf16.msra.mxu0 %v151
    %158 = vmatprep.subr.bf16.mxu0 0
    %159 = vmatpush1.bf16.msra.mxu0 0
    %160 = vmatprep.subr.bf16.mxu0 0
    %161 = vmatpush1.bf16.msra.mxu0 0
    %162 = vmatprep.subr.bf16.mxu0 0
    %163 = vmatpush1.bf16.msra.mxu0 0
    %164 = vmatprep.subr.bf16.mxu0 0
    %165 = vmatpush1.bf16.msra.mxu0 0
    %166 = vmatprep.subr.bf16.mxu0 0
    %167 = vmatpush1.bf16.msra.mxu0 0
    %168 = vmatprep.subr.bf16.mxu0 0
    %169 = vmatpush1.bf16.msra.mxu0 0
    %170 = vmatprep.subr.bf16.mxu0 0
    %171 = vmatpush1.bf16.msra.mxu0 0
    %172 = vmatprep.subr.bf16.mxu0 0
    %173 = vmatpush1.bf16.msra.mxu0 0
    %174 = vmatprep.subr.bf16.mxu0 0
    %175 = vmatpush1.bf16.msra.mxu0 0
    %176 = vmatprep.subr.bf16.mxu0 0
    %177 = vmatpush1.bf16.msra.mxu0 0
    %178 = vmatprep.subr.bf16.mxu0 0
    %179 = vmatpush1.bf16.msra.mxu0 0
    %180 = vmatprep.subr.bf16.mxu0 0
    %181 = vmatpush1.bf16.msra.mxu0 0
    %182 = vmatprep.subr.bf16.mxu0 0
    %183 = vmatpush1.bf16.msra.mxu0 0
    %184 = vmatprep.subr.bf16.mxu0 0
    %185 = vmatpush1.bf16.msra.mxu0 0
    %186 = vmatprep.mubr.bf16.mxu0 0
    %187 = vmatmul.mubr.bf16.gmra.mrb[0].mxu0 %v70
    %v188 = vpop.f32.mrb[0].mxu0
    %v189 = vadd.f32 %v140, %v188
    %v190 = vpop.f32.mrb[0].mxu0
    %v191 = vpop.f32.mrb[0].mxu0
    %v192 = vadd.f32 %v140, %v191
    %v193 = vpop.f32.mrb[0].mxu0
    %194 = vdwg.mxu0
    %196 = vset.pattern.permute.xlu0 0
    %197 = vperm.xlu0 %196, %v129
    %v198 = vpop.permute.xlu0 %197
    %201 = vset.pattern.permute.xlu0 0
    %202 = vperm.xlu0 %201, %v130
    %v203 = vpop.permute.xlu0 %202
    %v205 = vmul.f32 %v198, %v189
    %v206 = vmul.f32 %v203, %v192
    %s207 = scalar_lea.vmem [#allocation2], 16
    %v208 = vld [vmem:[%s207] sm:$0xf]
    %v209 = vld [vmem:[%s207 + $0x4] sm:$0xf]
    %v210 = vld [vmem:[%s207 + $0x8] sm:$0xf]
    %v211 = vld [vmem:[%s207 + $0xc] sm:$0xf]
    %s212 = scalar_lea.vmem %s4, 1
    %v213 = vld [vmem:[%s212] sm:$0x1]
    %v215 = vlaneseq
    %v216 = vshrl.u32 %v215, 7
    %v217 = vsub.s32 0, %v216
    %v218 = vrot.slane %v213, %v217
    %v224 = vunpack.c.l.b16 %v208
    %v225 = vunpack.c.l.b16 %v209
    %v226 = vunpack.c.l.b16 %v210
    %v227 = vunpack.c.l.b16 %v211
    %v228 = vpack.c.b16 %v225, %v224
    %v229 = vpack.c.b16 %v227, %v226
    %232 = vmatprep.subr.bf16.mxu0 0
    %233 = vmatpush1.bf16.msra.mxu0 %v228
    %234 = vmatprep.subr.bf16.mxu0 0
    %235 = vmatpush1.bf16.msra.mxu0 %v229
    %236 = vmatprep.subr.bf16.mxu0 0
    %237 = vmatpush1.bf16.msra.mxu0 0
    %238 = vmatprep.subr.bf16.mxu0 0
    %239 = vmatpush1.bf16.msra.mxu0 0
    %240 = vmatprep.subr.bf16.mxu0 0
    %241 = vmatpush1.bf16.msra.mxu0 0
    %242 = vmatprep.subr.bf16.mxu0 0
    %243 = vmatpush1.bf16.msra.mxu0 0
    %244 = vmatprep.subr.bf16.mxu0 0
    %245 = vmatpush1.bf16.msra.mxu0 0
    %246 = vmatprep.subr.bf16.mxu0 0
    %247 = vmatpush1.bf16.msra.mxu0 0
    %248 = vmatprep.subr.bf16.mxu0 0
    %249 = vmatpush1.bf16.msra.mxu0 0
    %250 = vmatprep.subr.bf16.mxu0 0
    %251 = vmatpush1.bf16.msra.mxu0 0
    %252 = vmatprep.subr.bf16.mxu0 0
    %253 = vmatpush1.bf16.msra.mxu0 0
    %254 = vmatprep.subr.bf16.mxu0 0
    %255 = vmatpush1.bf16.msra.mxu0 0
    %256 = vmatprep.subr.bf16.mxu0 0
    %257 = vmatpush1.bf16.msra.mxu0 0
    %258 = vmatprep.subr.bf16.mxu0 0
    %259 = vmatpush1.bf16.msra.mxu0 0
    %260 = vmatprep.subr.bf16.mxu0 0
    %261 = vmatpush1.bf16.msra.mxu0 0
    %262 = vmatprep.subr.bf16.mxu0 0
    %263 = vmatpush1.bf16.msra.mxu0 0
    %264 = vmatprep.mubr.bf16.mxu0 0
    %265 = vmatmul.mubr.bf16.gmra.mrb[0].mxu0 %v70
    %v266 = vpop.f32.mrb[0].mxu0
    %v267 = vadd.f32 %v218, %v266
    %v268 = vpop.f32.mrb[0].mxu0
    %v269 = vpop.f32.mrb[0].mxu0
    %v270 = vadd.f32 %v218, %v269
    %v271 = vpop.f32.mrb[0].mxu0
    %272 = vdwg.mxu0
    %273 = vset.pattern.permute.xlu0 1
    %274 = vperm.xlu0 %273, %v129
    %v275 = vpop.permute.xlu0 %274
    %277 = vset.pattern.permute.xlu0 1
    %278 = vperm.xlu0 %277, %v130
    %v279 = vpop.permute.xlu0 %278
    %v281 = vmul.f32 %v275, %v267
    %v282 = vmul.f32 %v279, %v270
    %v283 = vadd.f32 %v205, %v281
    %v284 = vadd.f32 %v206, %v282
    %s285 = scalar_lea.vmem [#allocation2], 32
    %v286 = vld [vmem:[%s285] sm:$0xf]
    %v287 = vld [vmem:[%s285 + $0x4] sm:$0xf]
    %v288 = vld [vmem:[%s285 + $0x8] sm:$0xf]
    %v289 = vld [vmem:[%s285 + $0xc] sm:$0xf]
    %s290 = scalar_lea.vmem %s4, 2
    %v291 = vld [vmem:[%s290] sm:$0x1]
    %v293 = vlaneseq
    %v294 = vshrl.u32 %v293, 7
    %v295 = vsub.s32 0, %v294
    %v296 = vrot.slane %v291, %v295
    %v302 = vunpack.c.l.b16 %v286
    %v303 = vunpack.c.l.b16 %v287
    %v304 = vunpack.c.l.b16 %v288
    %v305 = vunpack.c.l.b16 %v289
    %v306 = vpack.c.b16 %v303, %v302
    %v307 = vpack.c.b16 %v305, %v304
    %310 = vmatprep.subr.bf16.mxu0 0
    %311 = vmatpush1.bf16.msra.mxu0 %v306
    %312 = vmatprep.subr.bf16.mxu0 0
    %313 = vmatpush1.bf16.msra.mxu0 %v307
    %314 = vmatprep.subr.bf16.mxu0 0
    %315 = vmatpush1.bf16.msra.mxu0 0
    %316 = vmatprep.subr.bf16.mxu0 0
    %317 = vmatpush1.bf16.msra.mxu0 0
    %318 = vmatprep.subr.bf16.mxu0 0
    %319 = vmatpush1.bf16.msra.mxu0 0
    %320 = vmatprep.subr.bf16.mxu0 0
    %321 = vmatpush1.bf16.msra.mxu0 0
    %322 = vmatprep.subr.bf16.mxu0 0
    %323 = vmatpush1.bf16.msra.mxu0 0
    %324 = vmatprep.subr.bf16.mxu0 0
    %325 = vmatpush1.bf16.msra.mxu0 0
    %326 = vmatprep.subr.bf16.mxu0 0
    %327 = vmatpush1.bf16.msra.mxu0 0
    %328 = vmatprep.subr.bf16.mxu0 0
    %329 = vmatpush1.bf16.msra.mxu0 0
    %330 = vmatprep.subr.bf16.mxu0 0
    %331 = vmatpush1.bf16.msra.mxu0 0
    %332 = vmatprep.subr.bf16.mxu0 0
    %333 = vmatpush1.bf16.msra.mxu0 0
    %334 = vmatprep.subr.bf16.mxu0 0
    %335 = vmatpush1.bf16.msra.mxu0 0
    %336 = vmatprep.subr.bf16.mxu0 0
    %337 = vmatpush1.bf16.msra.mxu0 0
    %338 = vmatprep.subr.bf16.mxu0 0
    %339 = vmatpush1.bf16.msra.mxu0 0
    %340 = vmatprep.subr.bf16.mxu0 0
    %341 = vmatpush1.bf16.msra.mxu0 0
    %342 = vmatprep.mubr.bf16.mxu0 0
    %343 = vmatmul.mubr.bf16.gmra.mrb[0].mxu0 %v70
    %v344 = vpop.f32.mrb[0].mxu0
    %v345 = vadd.f32 %v296, %v344
    %v346 = vpop.f32.mrb[0].mxu0
    %v347 = vpop.f32.mrb[0].mxu0
    %v348 = vadd.f32 %v296, %v347
    %v349 = vpop.f32.mrb[0].mxu0
    %350 = vdwg.mxu0
    %351 = vset.pattern.permute.xlu0 2
    %352 = vperm.xlu0 %351, %v129
    %v353 = vpop.permute.xlu0 %352
    %355 = vset.pattern.permute.xlu0 2
    %356 = vperm.xlu0 %355, %v130
    %v357 = vpop.permute.xlu0 %356
    %v359 = vmul.f32 %v353, %v345
    %v360 = vmul.f32 %v357, %v348
    %v361 = vadd.f32 %v283, %v359
    %v362 = vadd.f32 %v284, %v360
    %s363 = scalar_lea.vmem [#allocation2], 48
    %v364 = vld [vmem:[%s363] sm:$0xf]
    %v365 = vld [vmem:[%s363 + $0x4] sm:$0xf]
    %v366 = vld [vmem:[%s363 + $0x8] sm:$0xf]
    %v367 = vld [vmem:[%s363 + $0xc] sm:$0xf]
    %s368 = scalar_lea.vmem %s4, 3
    %v369 = vld [vmem:[%s368] sm:$0x1]
    %v371 = vlaneseq
    %v372 = vshrl.u32 %v371, 7
    %v373 = vsub.s32 0, %v372
    %v374 = vrot.slane %v369, %v373
    %v380 = vunpack.c.l.b16 %v364
    %v381 = vunpack.c.l.b16 %v365
    %v382 = vunpack.c.l.b16 %v366
    %v383 = vunpack.c.l.b16 %v367
    %v384 = vpack.c.b16 %v381, %v380
    %v385 = vpack.c.b16 %v383, %v382
    %388 = vmatprep.subr.bf16.mxu0 0
    %389 = vmatpush1.bf16.msra.mxu0 %v384
    %390 = vmatprep.subr.bf16.mxu0 0
    %391 = vmatpush1.bf16.msra.mxu0 %v385
    %392 = vmatprep.subr.bf16.mxu0 0
    %393 = vmatpush1.bf16.msra.mxu0 0
    %394 = vmatprep.subr.bf16.mxu0 0
    %395 = vmatpush1.bf16.msra.mxu0 0
    %396 = vmatprep.subr.bf16.mxu0 0
    %397 = vmatpush1.bf16.msra.mxu0 0
    %398 = vmatprep.subr.bf16.mxu0 0
    %399 = vmatpush1.bf16.msra.mxu0 0
    %400 = vmatprep.subr.bf16.mxu0 0
    %401 = vmatpush1.bf16.msra.mxu0 0
    %402 = vmatprep.subr.bf16.mxu0 0
    %403 = vmatpush1.bf16.msra.mxu0 0
    %404 = vmatprep.subr.bf16.mxu0 0
    %405 = vmatpush1.bf16.msra.mxu0 0
    %406 = vmatprep.subr.bf16.mxu0 0
    %407 = vmatpush1.bf16.msra.mxu0 0
    %408 = vmatprep.subr.bf16.mxu0 0
    %409 = vmatpush1.bf16.msra.mxu0 0
    %410 = vmatprep.subr.bf16.mxu0 0
    %411 = vmatpush1.bf16.msra.mxu0 0
    %412 = vmatprep.subr.bf16.mxu0 0
    %413 = vmatpush1.bf16.msra.mxu0 0
    %414 = vmatprep.subr.bf16.mxu0 0
    %415 = vmatpush1.bf16.msra.mxu0 0
    %416 = vmatprep.subr.bf16.mxu0 0
    %417 = vmatpush1.bf16.msra.mxu0 0
    %418 = vmatprep.subr.bf16.mxu0 0
    %419 = vmatpush1.bf16.msra.mxu0 0
    %420 = vmatprep.mubr.bf16.mxu0 0
    %421 = vmatmul.mubr.bf16.gmra.mrb[0].mxu0 %v70
    %v422 = vpop.f32.mrb[0].mxu0
    %v423 = vadd.f32 %v374, %v422
    %v424 = vpop.f32.mrb[0].mxu0
    %v425 = vpop.f32.mrb[0].mxu0
    %v426 = vadd.f32 %v374, %v425
    %v427 = vpop.f32.mrb[0].mxu0
    %428 = vdwg.mxu0
    %429 = vset.pattern.permute.xlu0 3
    %430 = vperm.xlu0 %429, %v129
    %v431 = vpop.permute.xlu0 %430
    %433 = vset.pattern.permute.xlu0 3
    %434 = vperm.xlu0 %433, %v130
    %v435 = vpop.permute.xlu0 %434
    %v437 = vmul.f32 %v431, %v423
    %v438 = vmul.f32 %v435, %v426
    %v439 = vadd.f32 %v361, %v437
    %v440 = vadd.f32 %v362, %v438
    %s441 = scalar_lea.vmem [#allocation2], 64
    %v442 = vld [vmem:[%s441] sm:$0xf]
    %v443 = vld [vmem:[%s441 + $0x4] sm:$0xf]
    %v444 = vld [vmem:[%s441 + $0x8] sm:$0xf]
    %v445 = vld [vmem:[%s441 + $0xc] sm:$0xf]
    %s446 = scalar_lea.vmem %s4, 4
    %v447 = vld [vmem:[%s446] sm:$0x1]
    %v449 = vlaneseq
    %v450 = vshrl.u32 %v449, 7
    %v451 = vsub.s32 0, %v450
    %v452 = vrot.slane %v447, %v451
    %v458 = vunpack.c.l.b16 %v442
    %v459 = vunpack.c.l.b16 %v443
    %v460 = vunpack.c.l.b16 %v444
    %v461 = vunpack.c.l.b16 %v445
    %v462 = vpack.c.b16 %v459, %v458
    %v463 = vpack.c.b16 %v461, %v460
    %466 = vmatprep.subr.bf16.mxu0 0
    %467 = vmatpush1.bf16.msra.mxu0 %v462
    %468 = vmatprep.subr.bf16.mxu0 0
    %469 = vmatpush1.bf16.msra.mxu0 %v463
    %470 = vmatprep.subr.bf16.mxu0 0
    %471 = vmatpush1.bf16.msra.mxu0 0
    %472 = vmatprep.subr.bf16.mxu0 0
    %473 = vmatpush1.bf16.msra.mxu0 0
    %474 = vmatprep.subr.bf16.mxu0 0
    %475 = vmatpush1.bf16.msra.mxu0 0
    %476 = vmatprep.subr.bf16.mxu0 0
    %477 = vmatpush1.bf16.msra.mxu0 0
    %478 = vmatprep.subr.bf16.mxu0 0
    %479 = vmatpush1.bf16.msra.mxu0 0
    %480 = vmatprep.subr.bf16.mxu0 0
    %481 = vmatpush1.bf16.msra.mxu0 0
    %482 = vmatprep.subr.bf16.mxu0 0
    %483 = vmatpush1.bf16.msra.mxu0 0
    %484 = vmatprep.subr.bf16.mxu0 0
    %485 = vmatpush1.bf16.msra.mxu0 0
    %486 = vmatprep.subr.bf16.mxu0 0
    %487 = vmatpush1.bf16.msra.mxu0 0
    %488 = vmatprep.subr.bf16.mxu0 0
    %489 = vmatpush1.bf16.msra.mxu0 0
    %490 = vmatprep.subr.bf16.mxu0 0
    %491 = vmatpush1.bf16.msra.mxu0 0
    %492 = vmatprep.subr.bf16.mxu0 0
    %493 = vmatpush1.bf16.msra.mxu0 0
    %494 = vmatprep.subr.bf16.mxu0 0
    %495 = vmatpush1.bf16.msra.mxu0 0
    %496 = vmatprep.subr.bf16.mxu0 0
    %497 = vmatpush1.bf16.msra.mxu0 0
    %498 = vmatprep.mubr.bf16.mxu0 0
    %499 = vmatmul.mubr.bf16.gmra.mrb[0].mxu0 %v70
    %v500 = vpop.f32.mrb[0].mxu0
    %v501 = vadd.f32 %v452, %v500
    %v502 = vpop.f32.mrb[0].mxu0
    %v503 = vpop.f32.mrb[0].mxu0
    %v504 = vadd.f32 %v452, %v503
    %v505 = vpop.f32.mrb[0].mxu0
    %506 = vdwg.mxu0
    %507 = vset.pattern.permute.xlu0 4
    %508 = vperm.xlu0 %507, %v129
    %v509 = vpop.permute.xlu0 %508
    %511 = vset.pattern.permute.xlu0 4
    %512 = vperm.xlu0 %511, %v130
    %v513 = vpop.permute.xlu0 %512
    %v515 = vmul.f32 %v509, %v501
    %v516 = vmul.f32 %v513, %v504
    %v517 = vadd.f32 %v439, %v515
    %v518 = vadd.f32 %v440, %v516
    %s519 = scalar_lea.vmem [#allocation2], 80
    %v520 = vld [vmem:[%s519] sm:$0xf]
    %v521 = vld [vmem:[%s519 + $0x4] sm:$0xf]
    %v522 = vld [vmem:[%s519 + $0x8] sm:$0xf]
    %v523 = vld [vmem:[%s519 + $0xc] sm:$0xf]
    %s524 = scalar_lea.vmem %s4, 5
    %v525 = vld [vmem:[%s524] sm:$0x1]
    %v527 = vlaneseq
    %v528 = vshrl.u32 %v527, 7
    %v529 = vsub.s32 0, %v528
    %v530 = vrot.slane %v525, %v529
    %v536 = vunpack.c.l.b16 %v520
    %v537 = vunpack.c.l.b16 %v521
    %v538 = vunpack.c.l.b16 %v522
    %v539 = vunpack.c.l.b16 %v523
    %v540 = vpack.c.b16 %v537, %v536
    %v541 = vpack.c.b16 %v539, %v538
    %544 = vmatprep.subr.bf16.mxu0 0
    %545 = vmatpush1.bf16.msra.mxu0 %v540
    %546 = vmatprep.subr.bf16.mxu0 0
    %547 = vmatpush1.bf16.msra.mxu0 %v541
    %548 = vmatprep.subr.bf16.mxu0 0
    %549 = vmatpush1.bf16.msra.mxu0 0
    %550 = vmatprep.subr.bf16.mxu0 0
    %551 = vmatpush1.bf16.msra.mxu0 0
    %552 = vmatprep.subr.bf16.mxu0 0
    %553 = vmatpush1.bf16.msra.mxu0 0
    %554 = vmatprep.subr.bf16.mxu0 0
    %555 = vmatpush1.bf16.msra.mxu0 0
    %556 = vmatprep.subr.bf16.mxu0 0
    %557 = vmatpush1.bf16.msra.mxu0 0
    %558 = vmatprep.subr.bf16.mxu0 0
    %559 = vmatpush1.bf16.msra.mxu0 0
    %560 = vmatprep.subr.bf16.mxu0 0
    %561 = vmatpush1.bf16.msra.mxu0 0
    %562 = vmatprep.subr.bf16.mxu0 0
    %563 = vmatpush1.bf16.msra.mxu0 0
    %564 = vmatprep.subr.bf16.mxu0 0
    %565 = vmatpush1.bf16.msra.mxu0 0
    %566 = vmatprep.subr.bf16.mxu0 0
    %567 = vmatpush1.bf16.msra.mxu0 0
    %568 = vmatprep.subr.bf16.mxu0 0
    %569 = vmatpush1.bf16.msra.mxu0 0
    %570 = vmatprep.subr.bf16.mxu0 0
    %571 = vmatpush1.bf16.msra.mxu0 0
    %572 = vmatprep.subr.bf16.mxu0 0
    %573 = vmatpush1.bf16.msra.mxu0 0
    %574 = vmatprep.subr.bf16.mxu0 0
    %575 = vmatpush1.bf16.msra.mxu0 0
    %576 = vmatprep.mubr.bf16.mxu0 0
    %577 = vmatmul.mubr.bf16.gmra.mrb[0].mxu0 %v70
    %v578 = vpop.f32.mrb[0].mxu0
    %v579 = vadd.f32 %v530, %v578
    %v580 = vpop.f32.mrb[0].mxu0
    %v581 = vpop.f32.mrb[0].mxu0
    %v582 = vadd.f32 %v530, %v581
    %v583 = vpop.f32.mrb[0].mxu0
    %584 = vdwg.mxu0
    %585 = vset.pattern.permute.xlu0 5
    %586 = vperm.xlu0 %585, %v129
    %v587 = vpop.permute.xlu0 %586
    %589 = vset.pattern.permute.xlu0 5
    %590 = vperm.xlu0 %589, %v130
    %v591 = vpop.permute.xlu0 %590
    %v593 = vmul.f32 %v587, %v579
    %v594 = vmul.f32 %v591, %v582
    %v595 = vadd.f32 %v517, %v593
    %v596 = vadd.f32 %v518, %v594
    %s597 = scalar_lea.vmem [#allocation2], 96
    %v598 = vld [vmem:[%s597] sm:$0xf]
    %v599 = vld [vmem:[%s597 + $0x4] sm:$0xf]
    %v600 = vld [vmem:[%s597 + $0x8] sm:$0xf]
    %v601 = vld [vmem:[%s597 + $0xc] sm:$0xf]
    %s602 = scalar_lea.vmem %s4, 6
    %v603 = vld [vmem:[%s602] sm:$0x1]
    %v605 = vlaneseq
    %v606 = vshrl.u32 %v605, 7
    %v607 = vsub.s32 0, %v606
    %v608 = vrot.slane %v603, %v607
    %v614 = vunpack.c.l.b16 %v598
    %v615 = vunpack.c.l.b16 %v599
    %v616 = vunpack.c.l.b16 %v600
    %v617 = vunpack.c.l.b16 %v601
    %v618 = vpack.c.b16 %v615, %v614
    %v619 = vpack.c.b16 %v617, %v616
    %622 = vmatprep.subr.bf16.mxu0 0
    %623 = vmatpush1.bf16.msra.mxu0 %v618
    %624 = vmatprep.subr.bf16.mxu0 0
    %625 = vmatpush1.bf16.msra.mxu0 %v619
    %626 = vmatprep.subr.bf16.mxu0 0
    %627 = vmatpush1.bf16.msra.mxu0 0
    %628 = vmatprep.subr.bf16.mxu0 0
    %629 = vmatpush1.bf16.msra.mxu0 0
    %630 = vmatprep.subr.bf16.mxu0 0
    %631 = vmatpush1.bf16.msra.mxu0 0
    %632 = vmatprep.subr.bf16.mxu0 0
    %633 = vmatpush1.bf16.msra.mxu0 0
    %634 = vmatprep.subr.bf16.mxu0 0
    %635 = vmatpush1.bf16.msra.mxu0 0
    %636 = vmatprep.subr.bf16.mxu0 0
    %637 = vmatpush1.bf16.msra.mxu0 0
    %638 = vmatprep.subr.bf16.mxu0 0
    %639 = vmatpush1.bf16.msra.mxu0 0
    %640 = vmatprep.subr.bf16.mxu0 0
    %641 = vmatpush1.bf16.msra.mxu0 0
    %642 = vmatprep.subr.bf16.mxu0 0
    %643 = vmatpush1.bf16.msra.mxu0 0
    %644 = vmatprep.subr.bf16.mxu0 0
    %645 = vmatpush1.bf16.msra.mxu0 0
    %646 = vmatprep.subr.bf16.mxu0 0
    %647 = vmatpush1.bf16.msra.mxu0 0
    %648 = vmatprep.subr.bf16.mxu0 0
    %649 = vmatpush1.bf16.msra.mxu0 0
    %650 = vmatprep.subr.bf16.mxu0 0
    %651 = vmatpush1.bf16.msra.mxu0 0
    %652 = vmatprep.subr.bf16.mxu0 0
    %653 = vmatpush1.bf16.msra.mxu0 0
    %654 = vmatprep.mubr.bf16.mxu0 0
    %655 = vmatmul.mubr.bf16.gmra.mrb[0].mxu0 %v70
    %v656 = vpop.f32.mrb[0].mxu0
    %v657 = vadd.f32 %v608, %v656
    %v658 = vpop.f32.mrb[0].mxu0
    %v659 = vpop.f32.mrb[0].mxu0
    %v660 = vadd.f32 %v608, %v659
    %v661 = vpop.f32.mrb[0].mxu0
    %662 = vdwg.mxu0
    %663 = vset.pattern.permute.xlu0 6
    %664 = vperm.xlu0 %663, %v129
    %v665 = vpop.permute.xlu0 %664
    %667 = vset.pattern.permute.xlu0 6
    %668 = vperm.xlu0 %667, %v130
    %v669 = vpop.permute.xlu0 %668
    %v671 = vmul.f32 %v665, %v657
    %v672 = vmul.f32 %v669, %v660
    %v673 = vadd.f32 %v595, %v671
    %v674 = vadd.f32 %v596, %v672
    %s675 = scalar_lea.vmem [#allocation2], 112
    %v676 = vld [vmem:[%s675] sm:$0xf]
    %v677 = vld [vmem:[%s675 + $0x4] sm:$0xf]
    %v678 = vld [vmem:[%s675 + $0x8] sm:$0xf]
    %v679 = vld [vmem:[%s675 + $0xc] sm:$0xf]
    %s680 = scalar_lea.vmem %s4, 7
    %v681 = vld [vmem:[%s680] sm:$0x1]
    %v683 = vlaneseq
    %v684 = vshrl.u32 %v683, 7
    %v685 = vsub.s32 0, %v684
    %v686 = vrot.slane %v681, %v685
    %v692 = vunpack.c.l.b16 %v676
    %v693 = vunpack.c.l.b16 %v677
    %v694 = vunpack.c.l.b16 %v678
    %v695 = vunpack.c.l.b16 %v679
    %v696 = vpack.c.b16 %v693, %v692
    %v697 = vpack.c.b16 %v695, %v694
    %700 = vmatprep.subr.bf16.mxu0 0
    %701 = vmatpush1.bf16.msra.mxu0 %v696
    %702 = vmatprep.subr.bf16.mxu0 0
    %703 = vmatpush1.bf16.msra.mxu0 %v697
    %704 = vmatprep.subr.bf16.mxu0 0
    %705 = vmatpush1.bf16.msra.mxu0 0
    %706 = vmatprep.subr.bf16.mxu0 0
    %707 = vmatpush1.bf16.msra.mxu0 0
    %708 = vmatprep.subr.bf16.mxu0 0
    %709 = vmatpush1.bf16.msra.mxu0 0
    %710 = vmatprep.subr.bf16.mxu0 0
    %711 = vmatpush1.bf16.msra.mxu0 0
    %712 = vmatprep.subr.bf16.mxu0 0
    %713 = vmatpush1.bf16.msra.mxu0 0
    %714 = vmatprep.subr.bf16.mxu0 0
    %715 = vmatpush1.bf16.msra.mxu0 0
    %716 = vmatprep.subr.bf16.mxu0 0
    %717 = vmatpush1.bf16.msra.mxu0 0
    %718 = vmatprep.subr.bf16.mxu0 0
    %719 = vmatpush1.bf16.msra.mxu0 0
    %720 = vmatprep.subr.bf16.mxu0 0
    %721 = vmatpush1.bf16.msra.mxu0 0
    %722 = vmatprep.subr.bf16.mxu0 0
    %723 = vmatpush1.bf16.msra.mxu0 0
    %724 = vmatprep.subr.bf16.mxu0 0
    %725 = vmatpush1.bf16.msra.mxu0 0
    %726 = vmatprep.subr.bf16.mxu0 0
    %727 = vmatpush1.bf16.msra.mxu0 0
    %728 = vmatprep.subr.bf16.mxu0 0
    %729 = vmatpush1.bf16.msra.mxu0 0
    %730 = vmatprep.subr.bf16.mxu0 0
    %731 = vmatpush1.bf16.msra.mxu0 0
    %732 = vmatprep.mubr.bf16.mxu0 0
    %733 = vmatmul.mubr.bf16.gmra.mrb[0].mxu0 %v70
    %v734 = vpop.f32.mrb[0].mxu0
    %v735 = vadd.f32 %v686, %v734
    %v736 = vpop.f32.mrb[0].mxu0
    %v737 = vpop.f32.mrb[0].mxu0
    %v738 = vadd.f32 %v686, %v737
    %v739 = vpop.f32.mrb[0].mxu0
    %740 = vdwg.mxu0
    %741 = vset.pattern.permute.xlu0 7
    %742 = vperm.xlu0 %741, %v129
    %v743 = vpop.permute.xlu0 %742
    %745 = vset.pattern.permute.xlu0 7
    %746 = vperm.xlu0 %745, %v130
    %v747 = vpop.permute.xlu0 %746
    %v749 = vmul.f32 %v743, %v735
    %v750 = vmul.f32 %v747, %v738
    %v751 = vadd.f32 %v673, %v749
    %v752 = vadd.f32 %v674, %v750
    %v753 = vpack.c.bf16 %v752, %v751
    %v754 = vld [vmem:[%s5] sm:$0xf]
    %v755 = vld [vmem:[%s5 + $0x4] sm:$0xf]
    %v756 = vld [vmem:[%s5 + $0x8] sm:$0xf]
    %v757 = vld [vmem:[%s5 + $0xc] sm:$0xf]
    %v758 = vld [vmem:[%s5 + $0x10] sm:$0xf]
    %v759 = vld [vmem:[%s5 + $0x14] sm:$0xf]
    %v760 = vld [vmem:[%s5 + $0x18] sm:$0xf]
    %v761 = vld [vmem:[%s5 + $0x1c] sm:$0xf]
    %v762 = vld [vmem:[%s5 + $0x20] sm:$0xf]
    %v763 = vld [vmem:[%s5 + $0x24] sm:$0xf]
    %v764 = vld [vmem:[%s5 + $0x28] sm:$0xf]
    %v765 = vld [vmem:[%s5 + $0x2c] sm:$0xf]
    %v766 = vld [vmem:[%s5 + $0x30] sm:$0xf]
    %v767 = vld [vmem:[%s5 + $0x34] sm:$0xf]
    %v768 = vld [vmem:[%s5 + $0x38] sm:$0xf]
    %v769 = vld [vmem:[%s5 + $0x3c] sm:$0xf]
    %v770 = vld [vmem:[%s6] sm:$0x1]
    %v772 = vlaneseq
    %v773 = vshrl.u32 %v772, 7
    %v774 = vsub.s32 0, %v773
    %v775 = vrot.slane %v770, %v774
    %v793 = vunpack.c.l.b16 %v754
    %v794 = vunpack.c.l.b16 %v755
    %v795 = vunpack.c.l.b16 %v756
    %v796 = vunpack.c.l.b16 %v757
    %v797 = vunpack.c.l.b16 %v758
    %v798 = vunpack.c.l.b16 %v759
    %v799 = vunpack.c.l.b16 %v760
    %v800 = vunpack.c.l.b16 %v761
    %v801 = vunpack.c.l.b16 %v762
    %v802 = vunpack.c.l.b16 %v763
    %v803 = vunpack.c.l.b16 %v764
    %v804 = vunpack.c.l.b16 %v765
    %v805 = vunpack.c.l.b16 %v766
    %v806 = vunpack.c.l.b16 %v767
    %v807 = vunpack.c.l.b16 %v768
    %v808 = vunpack.c.l.b16 %v769
    %v809 = vpack.c.b16 %v794, %v793
    %v810 = vpack.c.b16 %v796, %v795
    %v811 = vpack.c.b16 %v798, %v797
    %v812 = vpack.c.b16 %v800, %v799
    %v813 = vpack.c.b16 %v802, %v801
    %v814 = vpack.c.b16 %v804, %v803
    %v815 = vpack.c.b16 %v806, %v805
    %v816 = vpack.c.b16 %v808, %v807
    %825 = vmatprep.subr.bf16.mxu0 0
    %826 = vmatpush1.bf16.msra.mxu0 %v809
    %827 = vmatprep.subr.bf16.mxu0 0
    %828 = vmatpush1.bf16.msra.mxu0 %v810
    %829 = vmatprep.subr.bf16.mxu0 0
    %830 = vmatpush1.bf16.msra.mxu0 %v811
    %831 = vmatprep.subr.bf16.mxu0 0
    %832 = vmatpush1.bf16.msra.mxu0 %v812
    %833 = vmatprep.subr.bf16.mxu0 0
    %834 = vmatpush1.bf16.msra.mxu0 %v813
    %835 = vmatprep.subr.bf16.mxu0 0
    %836 = vmatpush1.bf16.msra.mxu0 %v814
    %837 = vmatprep.subr.bf16.mxu0 0
    %838 = vmatpush1.bf16.msra.mxu0 %v815
    %839 = vmatprep.subr.bf16.mxu0 0
    %840 = vmatpush1.bf16.msra.mxu0 %v816
    %841 = vmatprep.subr.bf16.mxu0 0
    %842 = vmatpush1.bf16.msra.mxu0 0
    %843 = vmatprep.subr.bf16.mxu0 0
    %844 = vmatpush1.bf16.msra.mxu0 0
    %845 = vmatprep.subr.bf16.mxu0 0
    %846 = vmatpush1.bf16.msra.mxu0 0
    %847 = vmatprep.subr.bf16.mxu0 0
    %848 = vmatpush1.bf16.msra.mxu0 0
    %849 = vmatprep.subr.bf16.mxu0 0
    %850 = vmatpush1.bf16.msra.mxu0 0
    %851 = vmatprep.subr.bf16.mxu0 0
    %852 = vmatpush1.bf16.msra.mxu0 0
    %853 = vmatprep.subr.bf16.mxu0 0
    %854 = vmatpush1.bf16.msra.mxu0 0
    %855 = vmatprep.subr.bf16.mxu0 0
    %856 = vmatpush1.bf16.msra.mxu0 0
    %857 = vmatprep.mubr.bf16.mxu0 0
    %858 = vmatmul.mubr.bf16.gmra.mrb[0].mxu0 %v753
    %v859 = vpop.f32.mrb[0].mxu0
    %v860 = vadd.f32 %v775, %v859
    %v861 = vpop.f32.mrb[0].mxu0
    %v862 = vpop.f32.mrb[0].mxu0
    %v863 = vadd.f32 %v775, %v862
    %v864 = vpop.f32.mrb[0].mxu0
    %865 = vdwg.mxu0
    %866 = vst.msk [vmem:[#allocation5] sm:$0xff] %vm68, %v860
    %867 = vst.msk [vmem:[#allocation5 + $0x8] sm:$0xff] %vm68, %v863
    // Predicated region
    $region34: #{tpu_custom_call.1} parent=1 // pred_check
      _
    $region35: #{tpu_custom_call.1} parent=1 // pred_check_branch
      %869 = sbr.rel (0) target = $region37
    $region36: #{tpu_custom_call.1} parent=1 // pred_region
      %s871 = ssub.s32 256, 256
      %872 = vsyncadd [#allocation4], %s871
      %s873 = sshll.u32 [#allocation5], 4
      %s874 = int_to_ptr.vmem [resolvable:$true] %s873
      %879 = dma.vmem_to_hbm [thread:$0]  %s874, 256, %s7, [#allocation4], 128, 128, 8
    $region37: #{tpu_custom_call.1} parent=1 // pred_fallthru
      _
    // Predicated region
    $region38: #{tpu_custom_call.1} parent=1 // pred_check
      _
    $region39: #{tpu_custom_call.1} parent=1 // pred_check_branch
      %881 = sbr.rel (0) target = $region41
    $region40: #{tpu_custom_call.1} parent=1 // pred_region
      %882 = dma.done [#allocation4], 256
    $region41: #{tpu_custom_call.1} parent=1 // pred_fallthru
      _
    %883 = vsyncpa [#allocation3], 1
    %884 = vsyncpa [#allocation4], 1

// kernel: tpu_custom_call.1
$region0: #{tpu_custom_call.1}
  #allocation0 [shape = 'u32[]', space=smem, size = 0x4, offset = 0x4, fixed_abs, tag = 'smem constant byte address 0x4 - core index']
  #allocation1 [shape = 'u32[144,128]{1,0:T(1,128)}', space=vmem, size = 0x12000, scoped, tag = 'internal scratch']
  %s0 = inlined_call_operand.vmem [shape: f32[16,32], index: 0, kind: input, shape index: {}]
  %s1 = inlined_call_operand.vmem [shape: bf16[32,128], index: 1, kind: input, shape index: {}]
  %s2 = inlined_call_operand.vmem [shape: f32[1,128], index: 2, kind: input, shape index: {}]
  %s3 = inlined_call_operand.hbm [shape: bf16[8,32,128], index: 3, kind: input, shape index: {}]
  %s4 = inlined_call_operand.vmem [shape: f32[8,1,128], index: 4, kind: input, shape index: {}]
  %s5 = inlined_call_operand.vmem [shape: bf16[128,32], index: 5, kind: input, shape index: {}]
  %s6 = inlined_call_operand.vmem [shape: f32[1,32], index: 6, kind: input, shape index: {}]
  %s7 = inlined_call_operand.hbm [shape: f32[16,32], index: 7, kind: output, shape index: {}]
  %s8 = sld [smem:[#allocation0]]
  $region42: #{tpu_custom_call.1} parent=0
    _
  %s10 = ssub.s32 1, %s8
  %s11 = scalar_select 0, %s10, %s8
  $region1: #{tpu_custom_call.1} parent=0
    #allocation2 [shape = 'u8[65536]{0}', space=vmem, size = 0x10000, scoped, tag = 'input window, operand 3, single buffered']
    #allocation3 [shape = 's32[1]{0}', space=sflag, size = 0x4, scoped, tag = 'scoped memory for tpu_custom_call.1']
    #allocation4 [shape = 's32[1]{0}', space=sflag, size = 0x4, scoped, tag = 'scoped memory for tpu_custom_call.1']
    #allocation5 [shape = 'u8[8192]{0}', space=vmem, size = 0x2000, scoped, tag = 'output window, operand 0, single buffered']
    %12 = vsyncpa [#allocation3], 0
    %13 = vsyncpa [#allocation4], 0
    // Predicated region
    $region2: #{tpu_custom_call.1} parent=1 // pred_check
      _
    $region3: #{tpu_custom_call.1} parent=1 // pred_check_branch
      %15 = sbr.rel (0) target = $region5
    $region4: #{tpu_custom_call.1} parent=1 // pred_region
      _
    $region5: #{tpu_custom_call.1} parent=1 // pred_fallthru
      _
    // Predicated region
    $region6: #{tpu_custom_call.1} parent=1 // pred_check
      _
    $region7: #{tpu_custom_call.1} parent=1 // pred_check_branch
      %17 = sbr.rel (0) target = $region9
    $region8: #{tpu_custom_call.1} parent=1 // pred_region
      _
    $region9: #{tpu_custom_call.1} parent=1 // pred_fallthru
      _
    // Predicated region
    $region10: #{tpu_custom_call.1} parent=1 // pred_check
      _
    $region11: #{tpu_custom_call.1} parent=1 // pred_check_branch
      %19 = sbr.rel (0) target = $region13
    $region12: #{tpu_custom_call.1} parent=1 // pred_region
      _
    $region13: #{tpu_custom_call.1} parent=1 // pred_fallthru
      _
    // Predicated region
    $region14: #{tpu_custom_call.1} parent=1 // pred_check
      _
    $region15: #{tpu_custom_call.1} parent=1 // pred_check_branch
      %21 = sbr.rel (0) target = $region17
    $region16: #{tpu_custom_call.1} parent=1 // pred_region
      %s23 = ssub.s32 2048, 2048
      %24 = vsyncadd [#allocation3], %s23
      %s25 = sshll.u32 [#allocation2], 4
      %s26 = int_to_ptr.vmem [resolvable:$true] %s25
      %31 = dma.hbm_to_vmem [thread:$0]  %s3, 2048, %s26, [#allocation3], 64, 64, 4
    $region17: #{tpu_custom_call.1} parent=1 // pred_fallthru
      _
    // Predicated region
    $region18: #{tpu_custom_call.1} parent=1 // pred_check
      _
    $region19: #{tpu_custom_call.1} parent=1 // pred_check_branch
      %33 = sbr.rel (0) target = $region21
    $region20: #{tpu_custom_call.1} parent=1 // pred_region
      _
    $region21: #{tpu_custom_call.1} parent=1 // pred_fallthru
      _
    // Predicated region
    $region22: #{tpu_custom_call.1} parent=1 // pred_check
      _
    $region23: #{tpu_custom_call.1} parent=1 // pred_check_branch
      %35 = sbr.rel (0) target = $region25
    $region24: #{tpu_custom_call.1} parent=1 // pred_region
      _
    $region25: #{tpu_custom_call.1} parent=1 // pred_fallthru
      _
    // Predicated region
    $region26: #{tpu_custom_call.1} parent=1 // pred_check
      _
    $region27: #{tpu_custom_call.1} parent=1 // pred_check_branch
      %37 = sbr.rel (0) target = $region29
    $region28: #{tpu_custom_call.1} parent=1 // pred_region
      _
    $region29: #{tpu_custom_call.1} parent=1 // pred_fallthru
      _
    // Predicated region
    $region30: #{tpu_custom_call.1} parent=1 // pred_check
      _
    $region31: #{tpu_custom_call.1} parent=1 // pred_check_branch
      %39 = sbr.rel (0) target = $region33
    $region32: #{tpu_custom_call.1} parent=1 // pred_region
      %40 = dma.done [#allocation3], 2048
    $region33: #{tpu_custom_call.1} parent=1 // pred_fallthru
      _
    %v42 = vld [vmem:[%s0] sm:$0xff]
    %v43 = vld [vmem:[%s0 + $0x8] sm:$0xff]
    %v44 = vpack.c.bf16 %v43, %v42
    %v45 = vld [vmem:[%s1] sm:$0xf]
    %v46 = vld [vmem:[%s1 + $0x4] sm:$0xf]
    %v47 = vld [vmem:[%s1 + $0x8] sm:$0xf]
    %v48 = vld [vmem:[%s1 + $0xc] sm:$0xf]
    %v49 = vld [vmem:[%s2] sm:$0x1]
    %v51 = vlaneseq
    %v52 = vshrl.u32 %v51, 7
    %v53 = vsub.s32 0, %v52
    %v54 = vrot.slane %v49, %v53
    %v60 = vunpack.c.l.b16 %v45
    %v61 = vunpack.c.l.b16 %v46
    %v62 = vunpack.c.l.b16 %v47
    %v63 = vunpack.c.l.b16 %v48
    %v64 = vpack.c.b16 %v61, %v60
    %v65 = vpack.c.b16 %v63, %v62
    %vm68 = vcmask 261120
    %v70 = vsel %vm68, %v44, 0
    %72 = vmatprep.subr.bf16.mxu0 0
    %73 = vmatpush1.bf16.msra.mxu0 %v64
    %74 = vmatprep.subr.bf16.mxu0 0
    %75 = vmatpush1.bf16.msra.mxu0 %v65
    %76 = vmatprep.subr.bf16.mxu0 0
    %77 = vmatpush1.bf16.msra.mxu0 0
    %78 = vmatprep.subr.bf16.mxu0 0
    %79 = vmatpush1.bf16.msra.mxu0 0
    %80 = vmatprep.subr.bf16.mxu0 0
    %81 = vmatpush1.bf16.msra.mxu0 0
    %82 = vmatprep.subr.bf16.mxu0 0
    %83 = vmatpush1.bf16.msra.mxu0 0
    %84 = vmatprep.subr.bf16.mxu0 0
    %85 = vmatpush1.bf16.msra.mxu0 0
    %86 = vmatprep.subr.bf16.mxu0 0
    %87 = vmatpush1.bf16.msra.mxu0 0
    %88 = vmatprep.subr.bf16.mxu0 0
    %89 = vmatpush1.bf16.msra.mxu0 0
    %90 = vmatprep.subr.bf16.mxu0 0
    %91 = vmatpush1.bf16.msra.mxu0 0
    %92 = vmatprep.subr.bf16.mxu0 0
    %93 = vmatpush1.bf16.msra.mxu0 0
    %94 = vmatprep.subr.bf16.mxu0 0
    %95 = vmatpush1.bf16.msra.mxu0 0
    %96 = vmatprep.subr.bf16.mxu0 0
    %97 = vmatpush1.bf16.msra.mxu0 0
    %98 = vmatprep.subr.bf16.mxu0 0
    %99 = vmatpush1.bf16.msra.mxu0 0
    %100 = vmatprep.subr.bf16.mxu0 0
    %101 = vmatpush1.bf16.msra.mxu0 0
    %102 = vmatprep.subr.bf16.mxu0 0
    %103 = vmatpush1.bf16.msra.mxu0 0
    %104 = vmatprep.mubr.bf16.mxu0 0
    %105 = vmatmul.mubr.bf16.gmra.mrb[0].mxu0 %v70
    %v106 = vpop.f32.mrb[0].mxu0
    %v107 = vadd.f32 %v54, %v106
    %v108 = vpop.f32.mrb[0].mxu0
    %v109 = vpop.f32.mrb[0].mxu0
    %v110 = vadd.f32 %v54, %v109
    %v111 = vpop.f32.mrb[0].mxu0
    %112 = vdwg.mxu0
    %113 = vmax.xlane.f32.xlu0 %v107
    %v114 = vpop.xlane.xlu0 %113
    %115 = vmax.xlane.f32.xlu0 %v110
    %v116 = vpop.xlane.xlu0 %115
    %v117 = vsub.f32 %v107, %v114
    %v118 = vsub.f32 %v110, %v116
    %v119 = vmul.f32 %v117, 1.442695
    %v120 = vpow.pop %v119
    %v121 = vmul.f32 %v118, 1.442695
    %v122 = vpow.pop %v121
    %123 = vadd.xlane.f32.xlu0 %v120
    %v124 = vpop.xlane.xlu0 %123
    %125 = vadd.xlane.f32.xlu0 %v122
    %v126 = vpop.xlane.xlu0 %125
    %v127 = vrcp.pop %v124
    %v128 = vrcp.pop %v126
    %v129 = vmul.f32 %v120, %v127
    %v130 = vmul.f32 %v122, %v128
    %v131 = vld [vmem:[#allocation2] sm:$0xf]
    %v132 = vld [vmem:[#allocation2 + $0x4] sm:$0xf]
    %v133 = vld [vmem:[#allocation2 + $0x8] sm:$0xf]
    %v134 = vld [vmem:[#allocation2 + $0xc] sm:$0xf]
    %v135 = vld [vmem:[%s4] sm:$0x1]
    %v137 = vlaneseq
    %v138 = vshrl.u32 %v137, 7
    %v139 = vsub.s32 0, %v138
    %v140 = vrot.slane %v135, %v139
    %v146 = vunpack.c.l.b16 %v131
    %v147 = vunpack.c.l.b16 %v132
    %v148 = vunpack.c.l.b16 %v133
    %v149 = vunpack.c.l.b16 %v134
    %v150 = vpack.c.b16 %v147, %v146
    %v151 = vpack.c.b16 %v149, %v148
    %154 = vmatprep.subr.bf16.mxu0 0
    %155 = vmatpush1.bf16.msra.mxu0 %v150
    %156 = vmatprep.subr.bf16.mxu0 0
    %157 = vmatpush1.bf16.msra.mxu0 %v151
    %158 = vmatprep.subr.bf16.mxu0 0
    %159 = vmatpush1.bf16.msra.mxu0 0
    %160 = vmatprep.subr.bf16.mxu0 0
    %161 = vmatpush1.bf16.msra.mxu0 0
    %162 = vmatprep.subr.bf16.mxu0 0
    %163 = vmatpush1.bf16.msra.mxu0 0
    %164 = vmatprep.subr.bf16.mxu0 0
    %165 = vmatpush1.bf16.msra.mxu0 0
    %166 = vmatprep.subr.bf16.mxu0 0
    %167 = vmatpush1.bf16.msra.mxu0 0
    %168 = vmatprep.subr.bf16.mxu0 0
    %169 = vmatpush1.bf16.msra.mxu0 0
    %170 = vmatprep.subr.bf16.mxu0 0
    %171 = vmatpush1.bf16.msra.mxu0 0
    %172 = vmatprep.subr.bf16.mxu0 0
    %173 = vmatpush1.bf16.msra.mxu0 0
    %174 = vmatprep.subr.bf16.mxu0 0
    %175 = vmatpush1.bf16.msra.mxu0 0
    %176 = vmatprep.subr.bf16.mxu0 0
    %177 = vmatpush1.bf16.msra.mxu0 0
    %178 = vmatprep.subr.bf16.mxu0 0
    %179 = vmatpush1.bf16.msra.mxu0 0
    %180 = vmatprep.subr.bf16.mxu0 0
    %181 = vmatpush1.bf16.msra.mxu0 0
    %182 = vmatprep.subr.bf16.mxu0 0
    %183 = vmatpush1.bf16.msra.mxu0 0
    %184 = vmatprep.subr.bf16.mxu0 0
    %185 = vmatpush1.bf16.msra.mxu0 0
    %186 = vmatprep.mubr.bf16.mxu0 0
    %187 = vmatmul.mubr.bf16.gmra.mrb[0].mxu0 %v70
    %v188 = vpop.f32.mrb[0].mxu0
    %v189 = vadd.f32 %v140, %v188
    %v190 = vpop.f32.mrb[0].mxu0
    %v191 = vpop.f32.mrb[0].mxu0
    %v192 = vadd.f32 %v140, %v191
    %v193 = vpop.f32.mrb[0].mxu0
    %194 = vdwg.mxu0
    %196 = vset.pattern.permute.xlu0 0
    %197 = vperm.xlu0 %196, %v129
    %v198 = vpop.permute.xlu0 %197
    %201 = vset.pattern.permute.xlu0 0
    %202 = vperm.xlu0 %201, %v130
    %v203 = vpop.permute.xlu0 %202
    %v205 = vmul.f32 %v198, %v189
    %v206 = vmul.f32 %v203, %v192
    %s207 = scalar_lea.vmem [#allocation2], 16
    %v208 = vld [vmem:[%s207] sm:$0xf]
    %v209 = vld [vmem:[%s207 + $0x4] sm:$0xf]
    %v210 = vld [vmem:[%s207 + $0x8] sm:$0xf]
    %v211 = vld [vmem:[%s207 + $0xc] sm:$0xf]
    %s212 = scalar_lea.vmem %s4, 1
    %v213 = vld [vmem:[%s212] sm:$0x1]
    %v215 = vlaneseq
    %v216 = vshrl.u32 %v215, 7
    %v217 = vsub.s32 0, %v216
    %v218 = vrot.slane %v213, %v217
    %v224 = vunpack.c.l.b16 %v208
    %v225 = vunpack.c.l.b16 %v209
    %v226 = vunpack.c.l.b16 %v210
    %v227 = vunpack.c.l.b16 %v211
    %v228 = vpack.c.b16 %v225, %v224
    %v229 = vpack.c.b16 %v227, %v226
    %232 = vmatprep.subr.bf16.mxu0 0
    %233 = vmatpush1.bf16.msra.mxu0 %v228
    %234 = vmatprep.subr.bf16.mxu0 0
    %235 = vmatpush1.bf16.msra.mxu0 %v229
    %236 = vmatprep.subr.bf16.mxu0 0
    %237 = vmatpush1.bf16.msra.mxu0 0
    %238 = vmatprep.subr.bf16.mxu0 0
    %239 = vmatpush1.bf16.msra.mxu0 0
    %240 = vmatprep.subr.bf16.mxu0 0
    %241 = vmatpush1.bf16.msra.mxu0 0
    %242 = vmatprep.subr.bf16.mxu0 0
    %243 = vmatpush1.bf16.msra.mxu0 0
    %244 = vmatprep.subr.bf16.mxu0 0
    %245 = vmatpush1.bf16.msra.mxu0 0
    %246 = vmatprep.subr.bf16.mxu0 0
    %247 = vmatpush1.bf16.msra.mxu0 0
    %248 = vmatprep.subr.bf16.mxu0 0
    %249 = vmatpush1.bf16.msra.mxu0 0
    %250 = vmatprep.subr.bf16.mxu0 0
    %251 = vmatpush1.bf16.msra.mxu0 0
    %252 = vmatprep.subr.bf16.mxu0 0
    %253 = vmatpush1.bf16.msra.mxu0 0
    %254 = vmatprep.subr.bf16.mxu0 0
    %255 = vmatpush1.bf16.msra.mxu0 0
    %256 = vmatprep.subr.bf16.mxu0 0
    %257 = vmatpush1.bf16.msra.mxu0 0
    %258 = vmatprep.subr.bf16.mxu0 0
    %259 = vmatpush1.bf16.msra.mxu0 0
    %260 = vmatprep.subr.bf16.mxu0 0
    %261 = vmatpush1.bf16.msra.mxu0 0
    %262 = vmatprep.subr.bf16.mxu0 0
    %263 = vmatpush1.bf16.msra.mxu0 0
    %264 = vmatprep.mubr.bf16.mxu0 0
    %265 = vmatmul.mubr.bf16.gmra.mrb[0].mxu0 %v70
    %v266 = vpop.f32.mrb[0].mxu0
    %v267 = vadd.f32 %v218, %v266
    %v268 = vpop.f32.mrb[0].mxu0
    %v269 = vpop.f32.mrb[0].mxu0
    %v270 = vadd.f32 %v218, %v269
    %v271 = vpop.f32.mrb[0].mxu0
    %272 = vdwg.mxu0
    %273 = vset.pattern.permute.xlu0 1
    %274 = vperm.xlu0 %273, %v129
    %v275 = vpop.permute.xlu0 %274
    %277 = vset.pattern.permute.xlu0 1
    %278 = vperm.xlu0 %277, %v130
    %v279 = vpop.permute.xlu0 %278
    %v281 = vmul.f32 %v275, %v267
    %v282 = vmul.f32 %v279, %v270
    %v283 = vadd.f32 %v205, %v281
    %v284 = vadd.f32 %v206, %v282
    %s285 = scalar_lea.vmem [#allocation2], 32
    %v286 = vld [vmem:[%s285] sm:$0xf]
    %v287 = vld [vmem:[%s285 + $0x4] sm:$0xf]
    %v288 = vld [vmem:[%s285 + $0x8] sm:$0xf]
    %v289 = vld [vmem:[%s285 + $0xc] sm:$0xf]
    %s290 = scalar_lea.vmem %s4, 2
    %v291 = vld [vmem:[%s290] sm:$0x1]
    %v293 = vlaneseq
    %v294 = vshrl.u32 %v293, 7
    %v295 = vsub.s32 0, %v294
    %v296 = vrot.slane %v291, %v295
    %v302 = vunpack.c.l.b16 %v286
    %v303 = vunpack.c.l.b16 %v287
    %v304 = vunpack.c.l.b16 %v288
    %v305 = vunpack.c.l.b16 %v289
    %v306 = vpack.c.b16 %v303, %v302
    %v307 = vpack.c.b16 %v305, %v304
    %310 = vmatprep.subr.bf16.mxu0 0
    %311 = vmatpush1.bf16.msra.mxu0 %v306
    %312 = vmatprep.subr.bf16.mxu0 0
    %313 = vmatpush1.bf16.msra.mxu0 %v307
    %314 = vmatprep.subr.bf16.mxu0 0
    %315 = vmatpush1.bf16.msra.mxu0 0
    %316 = vmatprep.subr.bf16.mxu0 0
    %317 = vmatpush1.bf16.msra.mxu0 0
    %318 = vmatprep.subr.bf16.mxu0 0
    %319 = vmatpush1.bf16.msra.mxu0 0
    %320 = vmatprep.subr.bf16.mxu0 0
    %321 = vmatpush1.bf16.msra.mxu0 0
    %322 = vmatprep.subr.bf16.mxu0 0
    %323 = vmatpush1.bf16.msra.mxu0 0
    %324 = vmatprep.subr.bf16.mxu0 0
    %325 = vmatpush1.bf16.msra.mxu0 0
    %326 = vmatprep.subr.bf16.mxu0 0
    %327 = vmatpush1.bf16.msra.mxu0 0
    %328 = vmatprep.subr.bf16.mxu0 0
    %329 = vmatpush1.bf16.msra.mxu0 0
    %330 = vmatprep.subr.bf16.mxu0 0
    %331 = vmatpush1.bf16.msra.mxu0 0
    %332 = vmatprep.subr.bf16.mxu0 0
    %333 = vmatpush1.bf16.msra.mxu0 0
    %334 = vmatprep.subr.bf16.mxu0 0
    %335 = vmatpush1.bf16.msra.mxu0 0
    %336 = vmatprep.subr.bf16.mxu0 0
    %337 = vmatpush1.bf16.msra.mxu0 0
    %338 = vmatprep.subr.bf16.mxu0 0
    %339 = vmatpush1.bf16.msra.mxu0 0
    %340 = vmatprep.subr.bf16.mxu0 0
    %341 = vmatpush1.bf16.msra.mxu0 0
    %342 = vmatprep.mubr.bf16.mxu0 0
    %343 = vmatmul.mubr.bf16.gmra.mrb[0].mxu0 %v70
    %v344 = vpop.f32.mrb[0].mxu0
    %v345 = vadd.f32 %v296, %v344
    %v346 = vpop.f32.mrb[0].mxu0
    %v347 = vpop.f32.mrb[0].mxu0
    %v348 = vadd.f32 %v296, %v347
    %v349 = vpop.f32.mrb[0].mxu0
    %350 = vdwg.mxu0
    %351 = vset.pattern.permute.xlu0 2
    %352 = vperm.xlu0 %351, %v129
    %v353 = vpop.permute.xlu0 %352
    %355 = vset.pattern.permute.xlu0 2
    %356 = vperm.xlu0 %355, %v130
    %v357 = vpop.permute.xlu0 %356
    %v359 = vmul.f32 %v353, %v345
    %v360 = vmul.f32 %v357, %v348
    %v361 = vadd.f32 %v283, %v359
    %v362 = vadd.f32 %v284, %v360
    %s363 = scalar_lea.vmem [#allocation2], 48
    %v364 = vld [vmem:[%s363] sm:$0xf]
    %v365 = vld [vmem:[%s363 + $0x4] sm:$0xf]
    %v366 = vld [vmem:[%s363 + $0x8] sm:$0xf]
    %v367 = vld [vmem:[%s363 + $0xc] sm:$0xf]
    %s368 = scalar_lea.vmem %s4, 3
    %v369 = vld [vmem:[%s368] sm:$0x1]
    %v371 = vlaneseq
    %v372 = vshrl.u32 %v371, 7
    %v373 = vsub.s32 0, %v372
    %v374 = vrot.slane %v369, %v373
    %v380 = vunpack.c.l.b16 %v364
    %v381 = vunpack.c.l.b16 %v365
    %v382 = vunpack.c.l.b16 %v366
    %v383 = vunpack.c.l.b16 %v367
    %v384 = vpack.c.b16 %v381, %v380
    %v385 = vpack.c.b16 %v383, %v382
    %388 = vmatprep.subr.bf16.mxu0 0
    %389 = vmatpush1.bf16.msra.mxu0 %v384
    %390 = vmatprep.subr.bf16.mxu0 0
    %391 = vmatpush1.bf16.msra.mxu0 %v385
    %392 = vmatprep.subr.bf16.mxu0 0
    %393 = vmatpush1.bf16.msra.mxu0 0
    %394 = vmatprep.subr.bf16.mxu0 0
    %395 = vmatpush1.bf16.msra.mxu0 0
    %396 = vmatprep.subr.bf16.mxu0 0
    %397 = vmatpush1.bf16.msra.mxu0 0
    %398 = vmatprep.subr.bf16.mxu0 0
    %399 = vmatpush1.bf16.msra.mxu0 0
    %400 = vmatprep.subr.bf16.mxu0 0
    %401 = vmatpush1.bf16.msra.mxu0 0
    %402 = vmatprep.subr.bf16.mxu0 0
    %403 = vmatpush1.bf16.msra.mxu0 0
    %404 = vmatprep.subr.bf16.mxu0 0
    %405 = vmatpush1.bf16.msra.mxu0 0
    %406 = vmatprep.subr.bf16.mxu0 0
    %407 = vmatpush1.bf16.msra.mxu0 0
    %408 = vmatprep.subr.bf16.mxu0 0
    %409 = vmatpush1.bf16.msra.mxu0 0
    %410 = vmatprep.subr.bf16.mxu0 0
    %411 = vmatpush1.bf16.msra.mxu0 0
    %412 = vmatprep.subr.bf16.mxu0 0
    %413 = vmatpush1.bf16.msra.mxu0 0
    %414 = vmatprep.subr.bf16.mxu0 0
    %415 = vmatpush1.bf16.msra.mxu0 0
    %416 = vmatprep.subr.bf16.mxu0 0
    %417 = vmatpush1.bf16.msra.mxu0 0
    %418 = vmatprep.subr.bf16.mxu0 0
    %419 = vmatpush1.bf16.msra.mxu0 0
    %420 = vmatprep.mubr.bf16.mxu0 0
    %421 = vmatmul.mubr.bf16.gmra.mrb[0].mxu0 %v70
    %v422 = vpop.f32.mrb[0].mxu0
    %v423 = vadd.f32 %v374, %v422
    %v424 = vpop.f32.mrb[0].mxu0
    %v425 = vpop.f32.mrb[0].mxu0
    %v426 = vadd.f32 %v374, %v425
    %v427 = vpop.f32.mrb[0].mxu0
    %428 = vdwg.mxu0
    %429 = vset.pattern.permute.xlu0 3
    %430 = vperm.xlu0 %429, %v129
    %v431 = vpop.permute.xlu0 %430
    %433 = vset.pattern.permute.xlu0 3
    %434 = vperm.xlu0 %433, %v130
    %v435 = vpop.permute.xlu0 %434
    %v437 = vmul.f32 %v431, %v423
    %v438 = vmul.f32 %v435, %v426
    %v439 = vadd.f32 %v361, %v437
    %v440 = vadd.f32 %v362, %v438
    %s441 = scalar_lea.vmem [#allocation2], 64
    %v442 = vld [vmem:[%s441] sm:$0xf]
    %v443 = vld [vmem:[%s441 + $0x4] sm:$0xf]
    %v444 = vld [vmem:[%s441 + $0x8] sm:$0xf]
    %v445 = vld [vmem:[%s441 + $0xc] sm:$0xf]
    %s446 = scalar_lea.vmem %s4, 4
    %v447 = vld [vmem:[%s446] sm:$0x1]
    %v449 = vlaneseq
    %v450 = vshrl.u32 %v449, 7
    %v451 = vsub.s32 0, %v450
    %v452 = vrot.slane %v447, %v451
    %v458 = vunpack.c.l.b16 %v442
    %v459 = vunpack.c.l.b16 %v443
    %v460 = vunpack.c.l.b16 %v444
    %v461 = vunpack.c.l.b16 %v445
    %v462 = vpack.c.b16 %v459, %v458
    %v463 = vpack.c.b16 %v461, %v460
    %466 = vmatprep.subr.bf16.mxu0 0
    %467 = vmatpush1.bf16.msra.mxu0 %v462
    %468 = vmatprep.subr.bf16.mxu0 0
    %469 = vmatpush1.bf16.msra.mxu0 %v463
    %470 = vmatprep.subr.bf16.mxu0 0
    %471 = vmatpush1.bf16.msra.mxu0 0
    %472 = vmatprep.subr.bf16.mxu0 0
    %473 = vmatpush1.bf16.msra.mxu0 0
    %474 = vmatprep.subr.bf16.mxu0 0
    %475 = vmatpush1.bf16.msra.mxu0 0
    %476 = vmatprep.subr.bf16.mxu0 0
    %477 = vmatpush1.bf16.msra.mxu0 0
    %478 = vmatprep.subr.bf16.mxu0 0
    %479 = vmatpush1.bf16.msra.mxu0 0
    %480 = vmatprep.subr.bf16.mxu0 0
    %481 = vmatpush1.bf16.msra.mxu0 0
    %482 = vmatprep.subr.bf16.mxu0 0
    %483 = vmatpush1.bf16.msra.mxu0 0
    %484 = vmatprep.subr.bf16.mxu0 0
    %485 = vmatpush1.bf16.msra.mxu0 0
    %486 = vmatprep.subr.bf16.mxu0 0
    %487 = vmatpush1.bf16.msra.mxu0 0
    %488 = vmatprep.subr.bf16.mxu0 0
    %489 = vmatpush1.bf16.msra.mxu0 0
    %490 = vmatprep.subr.bf16.mxu0 0
    %491 = vmatpush1.bf16.msra.mxu0 0
    %492 = vmatprep.subr.bf16.mxu0 0
    %493 = vmatpush1.bf16.msra.mxu0 0
    %494 = vmatprep.subr.bf16.mxu0 0
    %495 = vmatpush1.bf16.msra.mxu0 0
    %496 = vmatprep.subr.bf16.mxu0 0
    %497 = vmatpush1.bf16.msra.mxu0 0
    %498 = vmatprep.mubr.bf16.mxu0 0
    %499 = vmatmul.mubr.bf16.gmra.mrb[0].mxu0 %v70
    %v500 = vpop.f32.mrb[0].mxu0
    %v501 = vadd.f32 %v452, %v500
    %v502 = vpop.f32.mrb[0].mxu0
    %v503 = vpop.f32.mrb[0].mxu0
    %v504 = vadd.f32 %v452, %v503
    %v505 = vpop.f32.mrb[0].mxu0
    %506 = vdwg.mxu0
    %507 = vset.pattern.permute.xlu0 4
    %508 = vperm.xlu0 %507, %v129
    %v509 = vpop.permute.xlu0 %508
    %511 = vset.pattern.permute.xlu0 4
    %512 = vperm.xlu0 %511, %v130
    %v513 = vpop.permute.xlu0 %512
    %v515 = vmul.f32 %v509, %v501
    %v516 = vmul.f32 %v513, %v504
    %v517 = vadd.f32 %v439, %v515
    %v518 = vadd.f32 %v440, %v516
    %s519 = scalar_lea.vmem [#allocation2], 80
    %v520 = vld [vmem:[%s519] sm:$0xf]
    %v521 = vld [vmem:[%s519 + $0x4] sm:$0xf]
    %v522 = vld [vmem:[%s519 + $0x8] sm:$0xf]
    %v523 = vld [vmem:[%s519 + $0xc] sm:$0xf]
    %s524 = scalar_lea.vmem %s4, 5
    %v525 = vld [vmem:[%s524] sm:$0x1]
    %v527 = vlaneseq
    %v528 = vshrl.u32 %v527, 7
    %v529 = vsub.s32 0, %v528
    %v530 = vrot.slane %v525, %v529
    %v536 = vunpack.c.l.b16 %v520
    %v537 = vunpack.c.l.b16 %v521
    %v538 = vunpack.c.l.b16 %v522
    %v539 = vunpack.c.l.b16 %v523
    %v540 = vpack.c.b16 %v537, %v536
    %v541 = vpack.c.b16 %v539, %v538
    %544 = vmatprep.subr.bf16.mxu0 0
    %545 = vmatpush1.bf16.msra.mxu0 %v540
    %546 = vmatprep.subr.bf16.mxu0 0
    %547 = vmatpush1.bf16.msra.mxu0 %v541
    %548 = vmatprep.subr.bf16.mxu0 0
    %549 = vmatpush1.bf16.msra.mxu0 0
    %550 = vmatprep.subr.bf16.mxu0 0
    %551 = vmatpush1.bf16.msra.mxu0 0
    %552 = vmatprep.subr.bf16.mxu0 0
    %553 = vmatpush1.bf16.msra.mxu0 0
    %554 = vmatprep.subr.bf16.mxu0 0
    %555 = vmatpush1.bf16.msra.mxu0 0
    %556 = vmatprep.subr.bf16.mxu0 0
    %557 = vmatpush1.bf16.msra.mxu0 0
    %558 = vmatprep.subr.bf16.mxu0 0
    %559 = vmatpush1.bf16.msra.mxu0 0
    %560 = vmatprep.subr.bf16.mxu0 0
    %561 = vmatpush1.bf16.msra.mxu0 0
    %562 = vmatprep.subr.bf16.mxu0 0
    %563 = vmatpush1.bf16.msra.mxu0 0
    %564 = vmatprep.subr.bf16.mxu0 0
    %565 = vmatpush1.bf16.msra.mxu0 0
    %566 = vmatprep.subr.bf16.mxu0 0
    %567 = vmatpush1.bf16.msra.mxu0 0
    %568 = vmatprep.subr.bf16.mxu0 0
    %569 = vmatpush1.bf16.msra.mxu0 0
    %570 = vmatprep.subr.bf16.mxu0 0
    %571 = vmatpush1.bf16.msra.mxu0 0
    %572 = vmatprep.subr.bf16.mxu0 0
    %573 = vmatpush1.bf16.msra.mxu0 0
    %574 = vmatprep.subr.bf16.mxu0 0
    %575 = vmatpush1.bf16.msra.mxu0 0
    %576 = vmatprep.mubr.bf16.mxu0 0
    %577 = vmatmul.mubr.bf16.gmra.mrb[0].mxu0 %v70
    %v578 = vpop.f32.mrb[0].mxu0
    %v579 = vadd.f32 %v530, %v578
    %v580 = vpop.f32.mrb[0].mxu0
    %v581 = vpop.f32.mrb[0].mxu0
    %v582 = vadd.f32 %v530, %v581
    %v583 = vpop.f32.mrb[0].mxu0
    %584 = vdwg.mxu0
    %585 = vset.pattern.permute.xlu0 5
    %586 = vperm.xlu0 %585, %v129
    %v587 = vpop.permute.xlu0 %586
    %589 = vset.pattern.permute.xlu0 5
    %590 = vperm.xlu0 %589, %v130
    %v591 = vpop.permute.xlu0 %590
    %v593 = vmul.f32 %v587, %v579
    %v594 = vmul.f32 %v591, %v582
    %v595 = vadd.f32 %v517, %v593
    %v596 = vadd.f32 %v518, %v594
    %s597 = scalar_lea.vmem [#allocation2], 96
    %v598 = vld [vmem:[%s597] sm:$0xf]
    %v599 = vld [vmem:[%s597 + $0x4] sm:$0xf]
    %v600 = vld [vmem:[%s597 + $0x8] sm:$0xf]
    %v601 = vld [vmem:[%s597 + $0xc] sm:$0xf]
    %s602 = scalar_lea.vmem %s4, 6
    %v603 = vld [vmem:[%s602] sm:$0x1]
    %v605 = vlaneseq
    %v606 = vshrl.u32 %v605, 7
    %v607 = vsub.s32 0, %v606
    %v608 = vrot.slane %v603, %v607
    %v614 = vunpack.c.l.b16 %v598
    %v615 = vunpack.c.l.b16 %v599
    %v616 = vunpack.c.l.b16 %v600
    %v617 = vunpack.c.l.b16 %v601
    %v618 = vpack.c.b16 %v615, %v614
    %v619 = vpack.c.b16 %v617, %v616
    %622 = vmatprep.subr.bf16.mxu0 0
    %623 = vmatpush1.bf16.msra.mxu0 %v618
    %624 = vmatprep.subr.bf16.mxu0 0
    %625 = vmatpush1.bf16.msra.mxu0 %v619
    %626 = vmatprep.subr.bf16.mxu0 0
    %627 = vmatpush1.bf16.msra.mxu0 0
    %628 = vmatprep.subr.bf16.mxu0 0
    %629 = vmatpush1.bf16.msra.mxu0 0
    %630 = vmatprep.subr.bf16.mxu0 0
    %631 = vmatpush1.bf16.msra.mxu0 0
    %632 = vmatprep.subr.bf16.mxu0 0
    %633 = vmatpush1.bf16.msra.mxu0 0
    %634 = vmatprep.subr.bf16.mxu0 0
    %635 = vmatpush1.bf16.msra.mxu0 0
    %636 = vmatprep.subr.bf16.mxu0 0
    %637 = vmatpush1.bf16.msra.mxu0 0
    %638 = vmatprep.subr.bf16.mxu0 0
    %639 = vmatpush1.bf16.msra.mxu0 0
    %640 = vmatprep.subr.bf16.mxu0 0
    %641 = vmatpush1.bf16.msra.mxu0 0
    %642 = vmatprep.subr.bf16.mxu0 0
    %643 = vmatpush1.bf16.msra.mxu0 0
    %644 = vmatprep.subr.bf16.mxu0 0
    %645 = vmatpush1.bf16.msra.mxu0 0
    %646 = vmatprep.subr.bf16.mxu0 0
    %647 = vmatpush1.bf16.msra.mxu0 0
    %648 = vmatprep.subr.bf16.mxu0 0
    %649 = vmatpush1.bf16.msra.mxu0 0
    %650 = vmatprep.subr.bf16.mxu0 0
    %651 = vmatpush1.bf16.msra.mxu0 0
    %652 = vmatprep.subr.bf16.mxu0 0
    %653 = vmatpush1.bf16.msra.mxu0 0
    %654 = vmatprep.mubr.bf16.mxu0 0
    %655 = vmatmul.mubr.bf16.gmra.mrb[0].mxu0 %v70
    %v656 = vpop.f32.mrb[0].mxu0
    %v657 = vadd.f32 %v608, %v656
    %v658 = vpop.f32.mrb[0].mxu0
    %v659 = vpop.f32.mrb[0].mxu0
    %v660 = vadd.f32 %v608, %v659
    %v661 = vpop.f32.mrb[0].mxu0
    %662 = vdwg.mxu0
    %663 = vset.pattern.permute.xlu0 6
    %664 = vperm.xlu0 %663, %v129
    %v665 = vpop.permute.xlu0 %664
    %667 = vset.pattern.permute.xlu0 6
    %668 = vperm.xlu0 %667, %v130
    %v669 = vpop.permute.xlu0 %668
    %v671 = vmul.f32 %v665, %v657
    %v672 = vmul.f32 %v669, %v660
    %v673 = vadd.f32 %v595, %v671
    %v674 = vadd.f32 %v596, %v672
    %s675 = scalar_lea.vmem [#allocation2], 112
    %v676 = vld [vmem:[%s675] sm:$0xf]
    %v677 = vld [vmem:[%s675 + $0x4] sm:$0xf]
    %v678 = vld [vmem:[%s675 + $0x8] sm:$0xf]
    %v679 = vld [vmem:[%s675 + $0xc] sm:$0xf]
    %s680 = scalar_lea.vmem %s4, 7
    %v681 = vld [vmem:[%s680] sm:$0x1]
    %v683 = vlaneseq
    %v684 = vshrl.u32 %v683, 7
    %v685 = vsub.s32 0, %v684
    %v686 = vrot.slane %v681, %v685
    %v692 = vunpack.c.l.b16 %v676
    %v693 = vunpack.c.l.b16 %v677
    %v694 = vunpack.c.l.b16 %v678
    %v695 = vunpack.c.l.b16 %v679
    %v696 = vpack.c.b16 %v693, %v692
    %v697 = vpack.c.b16 %v695, %v694
    %700 = vmatprep.subr.bf16.mxu0 0
    %701 = vmatpush1.bf16.msra.mxu0 %v696
    %702 = vmatprep.subr.bf16.mxu0 0
    %703 = vmatpush1.bf16.msra.mxu0 %v697
    %704 = vmatprep.subr.bf16.mxu0 0
    %705 = vmatpush1.bf16.msra.mxu0 0
    %706 = vmatprep.subr.bf16.mxu0 0
    %707 = vmatpush1.bf16.msra.mxu0 0
    %708 = vmatprep.subr.bf16.mxu0 0
    %709 = vmatpush1.bf16.msra.mxu0 0
    %710 = vmatprep.subr.bf16.mxu0 0
    %711 = vmatpush1.bf16.msra.mxu0 0
    %712 = vmatprep.subr.bf16.mxu0 0
    %713 = vmatpush1.bf16.msra.mxu0 0
    %714 = vmatprep.subr.bf16.mxu0 0
    %715 = vmatpush1.bf16.msra.mxu0 0
    %716 = vmatprep.subr.bf16.mxu0 0
    %717 = vmatpush1.bf16.msra.mxu0 0
    %718 = vmatprep.subr.bf16.mxu0 0
    %719 = vmatpush1.bf16.msra.mxu0 0
    %720 = vmatprep.subr.bf16.mxu0 0
    %721 = vmatpush1.bf16.msra.mxu0 0
    %722 = vmatprep.subr.bf16.mxu0 0
    %723 = vmatpush1.bf16.msra.mxu0 0
    %724 = vmatprep.subr.bf16.mxu0 0
    %725 = vmatpush1.bf16.msra.mxu0 0
    %726 = vmatprep.subr.bf16.mxu0 0
    %727 = vmatpush1.bf16.msra.mxu0 0
    %728 = vmatprep.subr.bf16.mxu0 0
    %729 = vmatpush1.bf16.msra.mxu0 0
    %730 = vmatprep.subr.bf16.mxu0 0
    %731 = vmatpush1.bf16.msra.mxu0 0
    %732 = vmatprep.mubr.bf16.mxu0 0
    %733 = vmatmul.mubr.bf16.gmra.mrb[0].mxu0 %v70
    %v734 = vpop.f32.mrb[0].mxu0
    %v735 = vadd.f32 %v686, %v734
    %v736 = vpop.f32.mrb[0].mxu0
    %v737 = vpop.f32.mrb[0].mxu0
    %v738 = vadd.f32 %v686, %v737
    %v739 = vpop.f32.mrb[0].mxu0
    %740 = vdwg.mxu0
    %741 = vset.pattern.permute.xlu0 7
    %742 = vperm.xlu0 %741, %v129
    %v743 = vpop.permute.xlu0 %742
    %745 = vset.pattern.permute.xlu0 7
    %746 = vperm.xlu0 %745, %v130
    %v747 = vpop.permute.xlu0 %746
    %v749 = vmul.f32 %v743, %v735
    %v750 = vmul.f32 %v747, %v738
    %v751 = vadd.f32 %v673, %v749
    %v752 = vadd.f32 %v674, %v750
    %v753 = vpack.c.bf16 %v752, %v751
    %v754 = vld [vmem:[%s5] sm:$0xf]
    %v755 = vld [vmem:[%s5 + $0x4] sm:$0xf]
    %v756 = vld [vmem:[%s5 + $0x8] sm:$0xf]
    %v757 = vld [vmem:[%s5 + $0xc] sm:$0xf]
    %v758 = vld [vmem:[%s5 + $0x10] sm:$0xf]
    %v759 = vld [vmem:[%s5 + $0x14] sm:$0xf]
    %v760 = vld [vmem:[%s5 + $0x18] sm:$0xf]
    %v761 = vld [vmem:[%s5 + $0x1c] sm:$0xf]
    %v762 = vld [vmem:[%s5 + $0x20] sm:$0xf]
    %v763 = vld [vmem:[%s5 + $0x24] sm:$0xf]
    %v764 = vld [vmem:[%s5 + $0x28] sm:$0xf]
    %v765 = vld [vmem:[%s5 + $0x2c] sm:$0xf]
    %v766 = vld [vmem:[%s5 + $0x30] sm:$0xf]
    %v767 = vld [vmem:[%s5 + $0x34] sm:$0xf]
    %v768 = vld [vmem:[%s5 + $0x38] sm:$0xf]
    %v769 = vld [vmem:[%s5 + $0x3c] sm:$0xf]
    %v770 = vld [vmem:[%s6] sm:$0x1]
    %v772 = vlaneseq
    %v773 = vshrl.u32 %v772, 7
    %v774 = vsub.s32 0, %v773
    %v775 = vrot.slane %v770, %v774
    %v793 = vunpack.c.l.b16 %v754
    %v794 = vunpack.c.l.b16 %v755
    %v795 = vunpack.c.l.b16 %v756
    %v796 = vunpack.c.l.b16 %v757
    %v797 = vunpack.c.l.b16 %v758
    %v798 = vunpack.c.l.b16 %v759
    %v799 = vunpack.c.l.b16 %v760
    %v800 = vunpack.c.l.b16 %v761
    %v801 = vunpack.c.l.b16 %v762
    %v802 = vunpack.c.l.b16 %v763
    %v803 = vunpack.c.l.b16 %v764
    %v804 = vunpack.c.l.b16 %v765
    %v805 = vunpack.c.l.b16 %v766
    %v806 = vunpack.c.l.b16 %v767
    %v807 = vunpack.c.l.b16 %v768
    %v808 = vunpack.c.l.b16 %v769
    %v809 = vpack.c.b16 %v794, %v793
    %v810 = vpack.c.b16 %v796, %v795
    %v811 = vpack.c.b16 %v798, %v797
    %v812 = vpack.c.b16 %v800, %v799
    %v813 = vpack.c.b16 %v802, %v801
    %v814 = vpack.c.b16 %v804, %v803
    %v815 = vpack.c.b16 %v806, %v805
    %v816 = vpack.c.b16 %v808, %v807
    %825 = vmatprep.subr.bf16.mxu0 0
    %826 = vmatpush1.bf16.msra.mxu0 %v809
    %827 = vmatprep.subr.bf16.mxu0 0
    %828 = vmatpush1.bf16.msra.mxu0 %v810
    %829 = vmatprep.subr.bf16.mxu0 0
    %830 = vmatpush1.bf16.msra.mxu0 %v811
    %831 = vmatprep.subr.bf16.mxu0 0
    %832 = vmatpush1.bf16.msra.mxu0 %v812
    %833 = vmatprep.subr.bf16.mxu0 0
    %834 = vmatpush1.bf16.msra.mxu0 %v813
    %835 = vmatprep.subr.bf16.mxu0 0
    %836 = vmatpush1.bf16.msra.mxu0 %v814
    %837 = vmatprep.subr.bf16.mxu0 0
    %838 = vmatpush1.bf16.msra.mxu0 %v815
    %839 = vmatprep.subr.bf16.mxu0 0
    %840 = vmatpush1.bf16.msra.mxu0 %v816
    %841 = vmatprep.subr.bf16.mxu0 0
    %842 = vmatpush1.bf16.msra.mxu0 0
    %843 = vmatprep.subr.bf16.mxu0 0
    %844 = vmatpush1.bf16.msra.mxu0 0
    %845 = vmatprep.subr.bf16.mxu0 0
    %846 = vmatpush1.bf16.msra.mxu0 0
    %847 = vmatprep.subr.bf16.mxu0 0
    %848 = vmatpush1.bf16.msra.mxu0 0
    %849 = vmatprep.subr.bf16.mxu0 0
    %850 = vmatpush1.bf16.msra.mxu0 0
    %851 = vmatprep.subr.bf16.mxu0 0
    %852 = vmatpush1.bf16.msra.mxu0 0
    %853 = vmatprep.subr.bf16.mxu0 0
    %854 = vmatpush1.bf16.msra.mxu0 0
    %855 = vmatprep.subr.bf16.mxu0 0
    %856 = vmatpush1.bf16.msra.mxu0 0
    %857 = vmatprep.mubr.bf16.mxu0 0
    %858 = vmatmul.mubr.bf16.gmra.mrb[0].mxu0 %v753
    %v859 = vpop.f32.mrb[0].mxu0
    %v860 = vadd.f32 %v775, %v859
    %v861 = vpop.f32.mrb[0].mxu0
    %v862 = vpop.f32.mrb[0].mxu0
    %v863 = vadd.f32 %v775, %v862
    %v864 = vpop.f32.mrb[0].mxu0
    %865 = vdwg.mxu0
    %866 = vst.msk [vmem:[#allocation5] sm:$0xff] %vm68, %v860
    %867 = vst.msk [vmem:[#allocation5 + $0x8] sm:$0xff] %vm68, %v863
    // Predicated region
    $region34: #{tpu_custom_call.1} parent=1 // pred_check
      _
    $region35: #{tpu_custom_call.1} parent=1 // pred_check_branch
      %869 = sbr.rel (0) target = $region37
    $region36: #{tpu_custom_call.1} parent=1 // pred_region
      %s871 = ssub.s32 256, 256
      %872 = vsyncadd [#allocation4], %s871
      %s873 = sshll.u32 [#allocation5], 4
      %s874 = int_to_ptr.vmem [resolvable:$true] %s873
      %879 = dma.vmem_to_hbm [thread:$0]  %s874, 256, %s7, [#allocation4], 128, 128, 8
    $region37: #{tpu_custom_call.1} parent=1 // pred_fallthru
      _
    // Predicated region
    $region38: #{tpu_custom_call.1} parent=1 // pred_check
      _
    $region39: #{tpu_custom_call.1} parent=1 // pred_check_branch
      %881 = sbr.rel (0) target = $region41
    $region40: #{tpu_custom_call.1} parent=1 // pred_region
      %882 = dma.done [#allocation4], 256
    $region41: #{tpu_custom_call.1} parent=1 // pred_fallthru
      _
    %883 = vsyncpa [#allocation3], 1
    %884 = vsyncpa [#allocation4], 1

</llo_original>
